<compile_context>
chip_gen: v6e
topology: v6e:2x2x1
jax: 0.10.0
libtpu: 0.0.40
codegen_flags: <defaults>
</compile_context>

<pallas_src>
import functools

import jax
import jax.numpy as jnp
from jax import lax
from jax.experimental import pallas as pl
from jax.experimental.pallas import tpu as pltpu

NUM_HEADS = 5
NEG_SLOPE = 0.2
_LANE = 128      # lane width; pad width of the folded attn_r column block
_WLT_ROWS = 8    # sublane-padded rows of the folded attn_l^T operand


def _fused_gat_kernel(x_ref, w_ref, wlt_ref, b_ref, out_ref, zall_ref, *,
                      num_heads, out_feats, n_nodes):
    layer = pl.program_id(0)
    n_layers = pl.num_programs(0)

    # Layer 0: seed the carried node features from the kernel input.
    @pl.when(layer == 0)
    def _():
        out_ref[...] = x_ref[...]

    feat = out_ref[...]                        # (N, F) f32 -- h carried across layers
    featb = feat.astype(jnp.bfloat16)

    # One wide MXU matmul: columns = [ z (H*F) | res (H*F) | er-fold (pad 128) ].
    zall_ref[...] = jnp.dot(featb, w_ref[...],
                            preferred_element_type=jnp.float32)

    # el for all heads with source nodes on the lane axis: (H_pad, N), NT matmul.
    el_t = lax.dot_general(wlt_ref[...], featb,
                           dimension_numbers=(((1,), (1,)), ((), ())),
                           preferred_element_type=jnp.float32)

    z_cols = num_heads * out_feats
    er = zall_ref[:, 2 * z_cols:2 * z_cols + _LANE]      # (N, 128); cols 0..H-1 valid
    bias = b_ref[...]                                    # (H, F)

    # Last layer has activation=None; earlier layers use per-head ReLU.
    relu_floor = jnp.where(layer != n_layers - 1, 0.0,
                           -jnp.inf).astype(jnp.float32)

    acc = jnp.zeros((n_nodes, out_feats), jnp.float32)
    for h in range(num_heads):                           # static unroll, H == 5
        lo = h * out_feats
        zh = zall_ref[:, lo:lo + out_feats]                          # (N, F)
        res_h = zall_ref[:, z_cols + lo:z_cols + lo + out_feats]     # (N, F)
        # Fully connected graph: score[dst, src] = leaky_relu(el[src] + er[dst]).
        e = el_t[h][None, :] + er[:, h:h + 1]                        # (N_dst, N_src)
        e = jnp.where(e > 0, e, NEG_SLOPE * e)
        e = e - jnp.max(e, axis=-1, keepdims=True)
        p = jnp.exp(e)
        alpha = p * pl.reciprocal(jnp.sum(p, axis=-1, keepdims=True), approx=True)
        rst = jnp.dot(alpha.astype(jnp.bfloat16), zh.astype(jnp.bfloat16),
                      preferred_element_type=jnp.float32)            # (N, F)
        head_out = rst + res_h + bias[h][None, :]
        acc = acc + jnp.maximum(head_out, relu_floor)                # ReLU / identity

    out_ref[...] = (acc * (1.0 / num_heads)).astype(out_ref.dtype)


def _prepare_fused_weights(params):
    """Stack per-layer weights; fold attn_l/attn_r into the fc weight (bf16)."""
    w_stack, wlt_stack, b_stack = [], [], []
    for p in params:
        w, res_w = p["w"], p["res_w"]
        fin = w.shape[0]
        fout = w.shape[1] // NUM_HEADS
        w3 = w.reshape(fin, NUM_HEADS, fout)
        wl = jnp.einsum("ihf,hf->ih", w3, p["attn_l"])      # (Fin, H)
        wr = jnp.einsum("ihf,hf->ih", w3, p["attn_r"])      # (Fin, H)
        er_block = jnp.zeros((fin, _LANE), jnp.float32).at[:, :NUM_HEADS].set(wr)
        w_main = jnp.concatenate([w, res_w, er_block], axis=1)   # (Fin, 2*H*F + 128)
        wl_t = jnp.zeros((_WLT_ROWS, fin), jnp.float32).at[:NUM_HEADS].set(wl.T)
        w_stack.append(w_main.astype(jnp.bfloat16))
        wlt_stack.append(wl_t.astype(jnp.bfloat16))
        b_stack.append(p["bias"].astype(jnp.float32))
    return jnp.stack(w_stack), jnp.stack(wlt_stack), jnp.stack(b_stack)


def gcn_pred_forward(x, params, condition=None):
    b, c, hh, ww = x.shape
    n = hh * ww
    h0 = x.reshape(b, c, n).transpose(0, 2, 1)[0]     # (N, C); forward uses batch 0
    if condition is not None:
        h0 = h0 + condition[0]

    w_all, wlt_all, bias_all = _prepare_fused_weights(params)
    n_layers, fin, wcols = w_all.shape
    fout = bias_all.shape[-1]
    assert fin == c and fout == c, "GcnPred uses n_hidden == feats_dim"
    assert n % 8 == 0 and fout % _LANE == 0

    kernel = functools.partial(_fused_gat_kernel, num_heads=NUM_HEADS,
                               out_feats=fout, n_nodes=n)
    out = pl.pallas_call(
        kernel,
        out_shape=jax.ShapeDtypeStruct((n, fout), jnp.float32),
        grid_spec=pltpu.PrefetchScalarGridSpec(
            num_scalar_prefetch=0,
            grid=(n_layers,),
            in_specs=[
                pl.BlockSpec((n, fin), lambda l: (0, 0)),                   # h0
                pl.BlockSpec((None, fin, wcols), lambda l: (l, 0, 0)),      # fused W
                pl.BlockSpec((None, _WLT_ROWS, fin), lambda l: (l, 0, 0)),  # attn_l^T
                pl.BlockSpec((None, NUM_HEADS, fout), lambda l: (l, 0, 0)), # bias
            ],
            out_specs=pl.BlockSpec((n, fout), lambda l: (0, 0)),
            scratch_shapes=[pltpu.VMEM((n, wcols), jnp.float32)],
        ),
        compiler_params=pltpu.CompilerParams(
            dimension_semantics=("arbitrary",)),   # layers are sequentially dependent
    )(h0, w_all, wlt_all, bias_all)

    return out[None].transpose(0, 2, 1).reshape(b, c, hh, ww)


def init_params(key, feats_dim):
    """Three GATConv layers: (F -> F, 5 heads) each (n_hidden == feats_dim)."""
    params = []
    for _ in range(3):
        key, k1, k2, k3, k4, k5 = jax.random.split(key, 6)
        scale = 1.0 / jnp.sqrt(feats_dim).astype(jnp.float32)
        params.append(dict(
            w=jax.random.normal(k1, (feats_dim, NUM_HEADS * feats_dim), jnp.float32) * scale,
            attn_l=jax.random.normal(k2, (NUM_HEADS, feats_dim), jnp.float32) * 0.1,
            attn_r=jax.random.normal(k3, (NUM_HEADS, feats_dim), jnp.float32) * 0.1,
            res_w=jax.random.normal(k4, (feats_dim, NUM_HEADS * feats_dim), jnp.float32) * scale,
            bias=jax.random.normal(k5, (NUM_HEADS, feats_dim), jnp.float32) * 0.01,
        ))
    return params


def _gat_layer_ref(h, p, apply_relu):
    """Pure-JAX f32 reference for one GAT layer (same math, no Pallas)."""
    n, _ = h.shape
    fout = p["w"].shape[1] // NUM_HEADS
    z = (h @ p["w"]).reshape(n, NUM_HEADS, fout)
    res = (h @ p["res_w"]).reshape(n, NUM_HEADS, fout)
    el = jnp.sum(z * p["attn_l"][None], axis=-1)          # (N, H)
    er = jnp.sum(z * p["attn_r"][None], axis=-1)          # (N, H)
    e = el[None, :, :] + er[:, None, :]                   # (N_dst, N_src, H)
    e = jnp.where(e > 0, e, NEG_SLOPE * e)
    alpha = jax.nn.softmax(e, axis=1)
    rst = jnp.einsum("dsh,shf->dhf", alpha, z)
    out = rst + res + p["bias"][None]
    if apply_relu:
        out = jnp.maximum(out, 0.0)
    return jnp.mean(out, axis=1)


def gcn_pred_ref(x, params):
    b, c, hh, ww = x.shape
    h = x.reshape(b, c, hh * ww).transpose(0, 2, 1)[0]
    for i, p in enumerate(params):
        h = _gat_layer_ref(h, p, apply_relu=(i < len(params) - 1))
    return h[None].transpose(0, 2, 1).reshape(b, c, hh, ww)


if __name__ == "__main__":
    # Small synthetic shapes: nodes_num = 8*8 = 64, feats_dim = 128, batch = 1
    # (the PyTorch forward's reshapes only work for batch == 1).
    B, C, H, W = 1, 128, 8, 8
    key = jax.random.PRNGKey(0)
    kx, kp = jax.random.split(key)
    x = jax.random.normal(kx, (B, C, H, W), jnp.float32)
    params = init_params(kp, C)

    fwd = jax.jit(gcn_pred_forward)
    y = jax.block_until_ready(fwd(x, params))
    assert y.shape == (B, C, H, W), y.shape
    assert bool(jnp.all(jnp.isfinite(y)))

    y_ref = jax.block_until_ready(gcn_pred_ref(x, params))
    max_err = float(jnp.max(jnp.abs(y - y_ref)))
    # bf16 MXU operands vs a pure-f32 reference -> modest tolerance.
    assert bool(jnp.allclose(y, y_ref, rtol=5e-2, atol=5e-2)), max_err

    print("KERNEL_OK")
</pallas_src>

<mosaic_0001>
module attributes {stable_mosaic.version = 11 : i64} {
  func.func @_fused_gat_kernel(%arg0: i32, %arg1: memref<64x128xf32, #tpu.memory_space<vmem>>, %arg2: memref<1x128x1408xbf16, #tpu.memory_space<vmem>>, %arg3: memref<1x8x128xbf16, #tpu.memory_space<vmem>>, %arg4: memref<1x5x128xf32, #tpu.memory_space<vmem>>, %arg5: memref<64x128xf32, #tpu.memory_space<vmem>>, %arg6: memref<64x1408xf32, #tpu.memory_space<vmem>>) attributes {dimension_semantics = [#tpu.dimension_semantics<arbitrary>], iteration_bounds = array<i64: 3>, scalar_prefetch = 0 : i64, scratch_operands = 1 : i64, tpu.core_type = #tpu.core_type<tc>, window_params = [{pipeline_mode = #tpu.pipeline_mode<synchronous>, transform_indices = @transform_0, window_bounds = array<i64: 64, 128>}, {transform_indices = @transform_1, window_bounds = array<i64: 1, 128, 1408>}, {transform_indices = @transform_2, window_bounds = array<i64: 1, 8, 128>}, {transform_indices = @transform_3, window_bounds = array<i64: 1, 5, 128>}, {pipeline_mode = #tpu.pipeline_mode<synchronous>, transform_indices = @transform_4, window_bounds = array<i64: 64, 128>}]} {
    %c0_i32 = arith.constant 0 : i32
    %0 = arith.cmpi eq, %arg0, %c0_i32 : i32
    %1 = arith.extui %0 : i1 to i32
    %c0_i32_0 = arith.constant 0 : i32
    %2 = arith.cmpi ne, %1, %c0_i32_0 : i32
    scf.if %2 {
      %c0_57 = arith.constant 0 : index
      %c0_58 = arith.constant 0 : index
      %201 = vector.load %arg1[%c0_57, %c0_58] : memref<64x128xf32, #tpu.memory_space<vmem>>, vector<64x128xf32>
      %c0_59 = arith.constant 0 : index
      %c0_60 = arith.constant 0 : index
      %202 = vector.load %arg5[%c0_59, %c0_60] : memref<64x128xf32, #tpu.memory_space<vmem>>, vector<64x128xf32>
      tpu.vector_store %arg5[%c0_59, %c0_60], %201 {strides = array<i32>} : memref<64x128xf32, #tpu.memory_space<vmem>>, vector<64x128xf32>,
    } else {
    }
    %c0 = arith.constant 0 : index
    %c0_1 = arith.constant 0 : index
    %3 = vector.load %arg5[%c0, %c0_1] : memref<64x128xf32, #tpu.memory_space<vmem>>, vector<64x128xf32>
    %4 = arith.truncf %3 : vector<64x128xf32> to vector<64x128xbf16>
    %c0_2 = arith.constant 0 : index
    %c0_3 = arith.constant 0 : index
    %c0_4 = arith.constant 0 : index
    %5 = vector.load %arg2[%c0_2, %c0_3, %c0_4] : memref<1x128x1408xbf16, #tpu.memory_space<vmem>>, vector<1x128x1408xbf16>
    %6 = vector.shape_cast %5 : vector<1x128x1408xbf16> to vector<128x1408xbf16>
    %cst = arith.constant dense<0.000000e+00> : vector<64x1408xf32>
    %7 = tpu.matmul %4, %6, %cst {dimension_numbers = #tpu.dot_dimension_numbers<[1], [0], [0], [1], [0, 0, 1, 1], [], []>} : vector<64x128xbf16>, vector<128x1408xbf16>, vector<64x1408xf32> -> vector<64x1408xf32>
    %c0_5 = arith.constant 0 : index
    %c0_6 = arith.constant 0 : index
    %8 = vector.load %arg6[%c0_5, %c0_6] : memref<64x1408xf32, #tpu.memory_space<vmem>>, vector<64x1408xf32>
    tpu.vector_store %arg6[%c0_5, %c0_6], %7 {strides = array<i32>} : memref<64x1408xf32, #tpu.memory_space<vmem>>, vector<64x1408xf32>,
    %c0_7 = arith.constant 0 : index
    %c0_8 = arith.constant 0 : index
    %c0_9 = arith.constant 0 : index
    %9 = vector.load %arg3[%c0_7, %c0_8, %c0_9] : memref<1x8x128xbf16, #tpu.memory_space<vmem>>, vector<1x8x128xbf16>
    %10 = vector.shape_cast %9 : vector<1x8x128xbf16> to vector<8x128xbf16>
    %cst_10 = arith.constant dense<0.000000e+00> : vector<8x64xf32>
    %11 = tpu.matmul %10, %4, %cst_10 {dimension_numbers = #tpu.dot_dimension_numbers<[1], [1], [0], [0], [0, 0, 1, 0], [], []>} : vector<8x128xbf16>, vector<64x128xbf16>, vector<8x64xf32> -> vector<8x64xf32>
    %c0_11 = arith.constant 0 : index
    %c1280 = arith.constant 1280 : index
    %12 = vector.load %arg6[%c0_11, %c1280] : memref<64x1408xf32, #tpu.memory_space<vmem>>, vector<64x128xf32>
    %c0_12 = arith.constant 0 : index
    %c0_13 = arith.constant 0 : index
    %c0_14 = arith.constant 0 : index
    %13 = vector.load %arg4[%c0_12, %c0_13, %c0_14] : memref<1x5x128xf32, #tpu.memory_space<vmem>>, vector<1x5x128xf32>
    %14 = vector.shape_cast %13 : vector<1x5x128xf32> to vector<5x128xf32>
    %c2_i32 = arith.constant 2 : i32
    %15 = arith.cmpi ne, %arg0, %c2_i32 : i32
    %cst_15 = arith.constant 0.000000e+00 : f32
    %cst_16 = arith.constant 0xFF800000 : f32
    %16 = arith.select %15, %cst_15, %cst_16 : f32
    %cst_17 = arith.constant 0.000000e+00 : f32
    %17 = vector.broadcast %cst_17 : f32 to vector<64x128xf32>
    %c0_18 = arith.constant 0 : index
    %c0_19 = arith.constant 0 : index
    %18 = vector.load %arg6[%c0_18, %c0_19] : memref<64x1408xf32, #tpu.memory_space<vmem>>, vector<64x128xf32>
    %c0_20 = arith.constant 0 : index
    %c640 = arith.constant 640 : index
    %19 = vector.load %arg6[%c0_20, %c640] : memref<64x1408xf32, #tpu.memory_space<vmem>>, vector<64x128xf32>
    %20 = vector.extract_strided_slice %11 {offsets = [0, 0], sizes = [1, 64], strides = [1, 1]} : vector<8x64xf32> to vector<1x64xf32>
    %21 = vector.shape_cast %20 : vector<1x64xf32> to vector<64xf32>
    %22 = vector.shape_cast %21 : vector<64xf32> to vector<1x64xf32>
    %23 = vector.extract_strided_slice %12 {offsets = [0, 0], sizes = [64, 1], strides = [1, 1]} : vector<64x128xf32> to vector<64x1xf32>
    %24 = vector.broadcast %22 : vector<1x64xf32> to vector<64x64xf32>
    %25 = vector.broadcast %23 : vector<64x1xf32> to vector<64x64xf32>
    %26 = arith.addf %24, %25 : vector<64x64xf32>
    %cst_21 = arith.constant 0.000000e+00 : f32
    %27 = vector.broadcast %cst_21 : f32 to vector<64x64xf32>
    %28 = arith.cmpf ogt, %26, %27 : vector<64x64xf32>
    %cst_22 = arith.constant 2.000000e-01 : f32
    %29 = vector.broadcast %cst_22 : f32 to vector<64x64xf32>
    %30 = arith.mulf %29, %26 : vector<64x64xf32>
    %31 = arith.select %28, %26, %30 : vector<64x64xi1>, vector<64x64xf32>
    %cst_23 = arith.constant dense<0xFF800000> : vector<64xf32>
    %32 = vector.multi_reduction <maximumf>, %31, %cst_23 [1] : vector<64x64xf32> to vector<64xf32>
    %33 = vector.shape_cast %32 : vector<64xf32> to vector<64x1xf32>
    %34 = vector.broadcast %33 : vector<64x1xf32> to vector<64x64xf32>
    %35 = arith.subf %31, %34 : vector<64x64xf32>
    %36 = math.exp %35 : vector<64x64xf32>
    %cst_24 = arith.constant dense<0.000000e+00> : vector<64xf32>
    %37 = vector.multi_reduction <add>, %36, %cst_24 [1] : vector<64x64xf32> to vector<64xf32>
    %38 = vector.shape_cast %37 : vector<64xf32> to vector<64x1xf32>
    %39 = tpu.reciprocal %38 {approx = true} : vector<64x1xf32> -> vector<64x1xf32>
    %40 = vector.broadcast %39 : vector<64x1xf32> to vector<64x64xf32>
    %41 = arith.mulf %36, %40 : vector<64x64xf32>
    %42 = arith.truncf %41 : vector<64x64xf32> to vector<64x64xbf16>
    %43 = arith.truncf %18 : vector<64x128xf32> to vector<64x128xbf16>
    %cst_25 = arith.constant dense<0.000000e+00> : vector<64x128xf32>
    %44 = tpu.matmul %42, %43, %cst_25 {dimension_numbers = #tpu.dot_dimension_numbers<[1], [0], [0], [1], [0, 0, 1, 1], [], []>} : vector<64x64xbf16>, vector<64x128xbf16>, vector<64x128xf32> -> vector<64x128xf32>
    %45 = arith.addf %44, %19 : vector<64x128xf32>
    %46 = vector.extract_strided_slice %14 {offsets = [0, 0], sizes = [1, 128], strides = [1, 1]} : vector<5x128xf32> to vector<1x128xf32>
    %47 = vector.shape_cast %46 : vector<1x128xf32> to vector<128xf32>
    %48 = vector.shape_cast %47 : vector<128xf32> to vector<1x128xf32>
    %49 = vector.broadcast %48 : vector<1x128xf32> to vector<64x128xf32>
    %50 = arith.addf %45, %49 : vector<64x128xf32>
    %51 = vector.broadcast %16 : f32 to vector<64x128xf32>
    %52 = arith.maximumf %50, %51 : vector<64x128xf32>
    %53 = arith.addf %17, %52 : vector<64x128xf32>
    %c0_26 = arith.constant 0 : index
    %c128 = arith.constant 128 : index
    %54 = vector.load %arg6[%c0_26, %c128] : memref<64x1408xf32, #tpu.memory_space<vmem>>, vector<64x128xf32>
    %c0_27 = arith.constant 0 : index
    %c768 = arith.constant 768 : index
    %55 = vector.load %arg6[%c0_27, %c768] : memref<64x1408xf32, #tpu.memory_space<vmem>>, vector<64x128xf32>
    %56 = vector.extract_strided_slice %11 {offsets = [1, 0], sizes = [1, 64], strides = [1, 1]} : vector<8x64xf32> to vector<1x64xf32>
    %57 = vector.shape_cast %56 : vector<1x64xf32> to vector<64xf32>
    %58 = vector.shape_cast %57 : vector<64xf32> to vector<1x64xf32>
    %59 = vector.extract_strided_slice %12 {offsets = [0, 1], sizes = [64, 1], strides = [1, 1]} : vector<64x128xf32> to vector<64x1xf32>
    %60 = vector.broadcast %58 : vector<1x64xf32> to vector<64x64xf32>
    %61 = vector.broadcast %59 : vector<64x1xf32> to vector<64x64xf32>
    %62 = arith.addf %60, %61 : vector<64x64xf32>
    %cst_28 = arith.constant 0.000000e+00 : f32
    %63 = vector.broadcast %cst_28 : f32 to vector<64x64xf32>
    %64 = arith.cmpf ogt, %62, %63 : vector<64x64xf32>
    %cst_29 = arith.constant 2.000000e-01 : f32
    %65 = vector.broadcast %cst_29 : f32 to vector<64x64xf32>
    %66 = arith.mulf %65, %62 : vector<64x64xf32>
    %67 = arith.select %64, %62, %66 : vector<64x64xi1>, vector<64x64xf32>
    %cst_30 = arith.constant dense<0xFF800000> : vector<64xf32>
    %68 = vector.multi_reduction <maximumf>, %67, %cst_30 [1] : vector<64x64xf32> to vector<64xf32>
    %69 = vector.shape_cast %68 : vector<64xf32> to vector<64x1xf32>
    %70 = vector.broadcast %69 : vector<64x1xf32> to vector<64x64xf32>
    %71 = arith.subf %67, %70 : vector<64x64xf32>
    %72 = math.exp %71 : vector<64x64xf32>
    %cst_31 = arith.constant dense<0.000000e+00> : vector<64xf32>
    %73 = vector.multi_reduction <add>, %72, %cst_31 [1] : vector<64x64xf32> to vector<64xf32>
    %74 = vector.shape_cast %73 : vector<64xf32> to vector<64x1xf32>
    %75 = tpu.reciprocal %74 {approx = true} : vector<64x1xf32> -> vector<64x1xf32>
    %76 = vector.broadcast %75 : vector<64x1xf32> to vector<64x64xf32>
    %77 = arith.mulf %72, %76 : vector<64x64xf32>
    %78 = arith.truncf %77 : vector<64x64xf32> to vector<64x64xbf16>
    %79 = arith.truncf %54 : vector<64x128xf32> to vector<64x128xbf16>
    %cst_32 = arith.constant dense<0.000000e+00> : vector<64x128xf32>
    %80 = tpu.matmul %78, %79, %cst_32 {dimension_numbers = #tpu.dot_dimension_numbers<[1], [0], [0], [1], [0, 0, 1, 1], [], []>} : vector<64x64xbf16>, vector<64x128xbf16>, vector<64x128xf32> -> vector<64x128xf32>
    %81 = arith.addf %80, %55 : vector<64x128xf32>
    %82 = vector.extract_strided_slice %14 {offsets = [1, 0], sizes = [1, 128], strides = [1, 1]} : vector<5x128xf32> to vector<1x128xf32>
    %83 = vector.shape_cast %82 : vector<1x128xf32> to vector<128xf32>
    %84 = vector.shape_cast %83 : vector<128xf32> to vector<1x128xf32>
    %85 = vector.broadcast %84 : vector<1x128xf32> to vector<64x128xf32>
    %86 = arith.addf %81, %85 : vector<64x128xf32>
    %87 = vector.broadcast %16 : f32 to vector<64x128xf32>
    %88 = arith.maximumf %86, %87 : vector<64x128xf32>
    %89 = arith.addf %53, %88 : vector<64x128xf32>
    %c0_33 = arith.constant 0 : index
    %c256 = arith.constant 256 : index
    %90 = vector.load %arg6[%c0_33, %c256] : memref<64x1408xf32, #tpu.memory_space<vmem>>, vector<64x128xf32>
    %c0_34 = arith.constant 0 : index
    %c896 = arith.constant 896 : index
    %91 = vector.load %arg6[%c0_34, %c896] : memref<64x1408xf32, #tpu.memory_space<vmem>>, vector<64x128xf32>
    %92 = vector.extract_strided_slice %11 {offsets = [2, 0], sizes = [1, 64], strides = [1, 1]} : vector<8x64xf32> to vector<1x64xf32>
    %93 = vector.shape_cast %92 : vector<1x64xf32> to vector<64xf32>
    %94 = vector.shape_cast %93 : vector<64xf32> to vector<1x64xf32>
    %95 = vector.extract_strided_slice %12 {offsets = [0, 2], sizes = [64, 1], strides = [1, 1]} : vector<64x128xf32> to vector<64x1xf32>
    %96 = vector.broadcast %94 : vector<1x64xf32> to vector<64x64xf32>
    %97 = vector.broadcast %95 : vector<64x1xf32> to vector<64x64xf32>
    %98 = arith.addf %96, %97 : vector<64x64xf32>
    %cst_35 = arith.constant 0.000000e+00 : f32
    %99 = vector.broadcast %cst_35 : f32 to vector<64x64xf32>
    %100 = arith.cmpf ogt, %98, %99 : vector<64x64xf32>
    %cst_36 = arith.constant 2.000000e-01 : f32
    %101 = vector.broadcast %cst_36 : f32 to vector<64x64xf32>
    %102 = arith.mulf %101, %98 : vector<64x64xf32>
    %103 = arith.select %100, %98, %102 : vector<64x64xi1>, vector<64x64xf32>
    %cst_37 = arith.constant dense<0xFF800000> : vector<64xf32>
    %104 = vector.multi_reduction <maximumf>, %103, %cst_37 [1] : vector<64x64xf32> to vector<64xf32>
    %105 = vector.shape_cast %104 : vector<64xf32> to vector<64x1xf32>
    %106 = vector.broadcast %105 : vector<64x1xf32> to vector<64x64xf32>
    %107 = arith.subf %103, %106 : vector<64x64xf32>
    %108 = math.exp %107 : vector<64x64xf32>
    %cst_38 = arith.constant dense<0.000000e+00> : vector<64xf32>
    %109 = vector.multi_reduction <add>, %108, %cst_38 [1] : vector<64x64xf32> to vector<64xf32>
    %110 = vector.shape_cast %109 : vector<64xf32> to vector<64x1xf32>
    %111 = tpu.reciprocal %110 {approx = true} : vector<64x1xf32> -> vector<64x1xf32>
    %112 = vector.broadcast %111 : vector<64x1xf32> to vector<64x64xf32>
    %113 = arith.mulf %108, %112 : vector<64x64xf32>
    %114 = arith.truncf %113 : vector<64x64xf32> to vector<64x64xbf16>
    %115 = arith.truncf %90 : vector<64x128xf32> to vector<64x128xbf16>
    %cst_39 = arith.constant dense<0.000000e+00> : vector<64x128xf32>
    %116 = tpu.matmul %114, %115, %cst_39 {dimension_numbers = #tpu.dot_dimension_numbers<[1], [0], [0], [1], [0, 0, 1, 1], [], []>} : vector<64x64xbf16>, vector<64x128xbf16>, vector<64x128xf32> -> vector<64x128xf32>
    %117 = arith.addf %116, %91 : vector<64x128xf32>
    %118 = vector.extract_strided_slice %14 {offsets = [2, 0], sizes = [1, 128], strides = [1, 1]} : vector<5x128xf32> to vector<1x128xf32>
    %119 = vector.shape_cast %118 : vector<1x128xf32> to vector<128xf32>
    %120 = vector.shape_cast %119 : vector<128xf32> to vector<1x128xf32>
    %121 = vector.broadcast %120 : vector<1x128xf32> to vector<64x128xf32>
    %122 = arith.addf %117, %121 : vector<64x128xf32>
    %123 = vector.broadcast %16 : f32 to vector<64x128xf32>
    %124 = arith.maximumf %122, %123 : vector<64x128xf32>
    %125 = arith.addf %89, %124 : vector<64x128xf32>
    %c0_40 = arith.constant 0 : index
    %c384 = arith.constant 384 : index
    %126 = vector.load %arg6[%c0_40, %c384] : memref<64x1408xf32, #tpu.memory_space<vmem>>, vector<64x128xf32>
    %c0_41 = arith.constant 0 : index
    %c1024 = arith.constant 1024 : index
    %127 = vector.load %arg6[%c0_41, %c1024] : memref<64x1408xf32, #tpu.memory_space<vmem>>, vector<64x128xf32>
    %128 = vector.extract_strided_slice %11 {offsets = [3, 0], sizes = [1, 64], strides = [1, 1]} : vector<8x64xf32> to vector<1x64xf32>
    %129 = vector.shape_cast %128 : vector<1x64xf32> to vector<64xf32>
    %130 = vector.shape_cast %129 : vector<64xf32> to vector<1x64xf32>
    %131 = vector.extract_strided_slice %12 {offsets = [0, 3], sizes = [64, 1], strides = [1, 1]} : vector<64x128xf32> to vector<64x1xf32>
    %132 = vector.broadcast %130 : vector<1x64xf32> to vector<64x64xf32>
    %133 = vector.broadcast %131 : vector<64x1xf32> to vector<64x64xf32>
    %134 = arith.addf %132, %133 : vector<64x64xf32>
    %cst_42 = arith.constant 0.000000e+00 : f32
    %135 = vector.broadcast %cst_42 : f32 to vector<64x64xf32>
    %136 = arith.cmpf ogt, %134, %135 : vector<64x64xf32>
    %cst_43 = arith.constant 2.000000e-01 : f32
    %137 = vector.broadcast %cst_43 : f32 to vector<64x64xf32>
    %138 = arith.mulf %137, %134 : vector<64x64xf32>
    %139 = arith.select %136, %134, %138 : vector<64x64xi1>, vector<64x64xf32>
    %cst_44 = arith.constant dense<0xFF800000> : vector<64xf32>
    %140 = vector.multi_reduction <maximumf>, %139, %cst_44 [1] : vector<64x64xf32> to vector<64xf32>
    %141 = vector.shape_cast %140 : vector<64xf32> to vector<64x1xf32>
    %142 = vector.broadcast %141 : vector<64x1xf32> to vector<64x64xf32>
    %143 = arith.subf %139, %142 : vector<64x64xf32>
    %144 = math.exp %143 : vector<64x64xf32>
    %cst_45 = arith.constant dense<0.000000e+00> : vector<64xf32>
    %145 = vector.multi_reduction <add>, %144, %cst_45 [1] : vector<64x64xf32> to vector<64xf32>
    %146 = vector.shape_cast %145 : vector<64xf32> to vector<64x1xf32>
    %147 = tpu.reciprocal %146 {approx = true} : vector<64x1xf32> -> vector<64x1xf32>
    %148 = vector.broadcast %147 : vector<64x1xf32> to vector<64x64xf32>
    %149 = arith.mulf %144, %148 : vector<64x64xf32>
    %150 = arith.truncf %149 : vector<64x64xf32> to vector<64x64xbf16>
    %151 = arith.truncf %126 : vector<64x128xf32> to vector<64x128xbf16>
    %cst_46 = arith.constant dense<0.000000e+00> : vector<64x128xf32>
    %152 = tpu.matmul %150, %151, %cst_46 {dimension_numbers = #tpu.dot_dimension_numbers<[1], [0], [0], [1], [0, 0, 1, 1], [], []>} : vector<64x64xbf16>, vector<64x128xbf16>, vector<64x128xf32> -> vector<64x128xf32>
    %153 = arith.addf %152, %127 : vector<64x128xf32>
    %154 = vector.extract_strided_slice %14 {offsets = [3, 0], sizes = [1, 128], strides = [1, 1]} : vector<5x128xf32> to vector<1x128xf32>
    %155 = vector.shape_cast %154 : vector<1x128xf32> to vector<128xf32>
    %156 = vector.shape_cast %155 : vector<128xf32> to vector<1x128xf32>
    %157 = vector.broadcast %156 : vector<1x128xf32> to vector<64x128xf32>
    %158 = arith.addf %153, %157 : vector<64x128xf32>
    %159 = vector.broadcast %16 : f32 to vector<64x128xf32>
    %160 = arith.maximumf %158, %159 : vector<64x128xf32>
    %161 = arith.addf %125, %160 : vector<64x128xf32>
    %c0_47 = arith.constant 0 : index
    %c512 = arith.constant 512 : index
    %162 = vector.load %arg6[%c0_47, %c512] : memref<64x1408xf32, #tpu.memory_space<vmem>>, vector<64x128xf32>
    %c0_48 = arith.constant 0 : index
    %c1152 = arith.constant 1152 : index
    %163 = vector.load %arg6[%c0_48, %c1152] : memref<64x1408xf32, #tpu.memory_space<vmem>>, vector<64x128xf32>
    %164 = vector.extract_strided_slice %11 {offsets = [4, 0], sizes = [1, 64], strides = [1, 1]} : vector<8x64xf32> to vector<1x64xf32>
    %165 = vector.shape_cast %164 : vector<1x64xf32> to vector<64xf32>
    %166 = vector.shape_cast %165 : vector<64xf32> to vector<1x64xf32>
    %167 = vector.extract_strided_slice %12 {offsets = [0, 4], sizes = [64, 1], strides = [1, 1]} : vector<64x128xf32> to vector<64x1xf32>
    %168 = vector.broadcast %166 : vector<1x64xf32> to vector<64x64xf32>
    %169 = vector.broadcast %167 : vector<64x1xf32> to vector<64x64xf32>
    %170 = arith.addf %168, %169 : vector<64x64xf32>
    %cst_49 = arith.constant 0.000000e+00 : f32
    %171 = vector.broadcast %cst_49 : f32 to vector<64x64xf32>
    %172 = arith.cmpf ogt, %170, %171 : vector<64x64xf32>
    %cst_50 = arith.constant 2.000000e-01 : f32
    %173 = vector.broadcast %cst_50 : f32 to vector<64x64xf32>
    %174 = arith.mulf %173, %170 : vector<64x64xf32>
    %175 = arith.select %172, %170, %174 : vector<64x64xi1>, vector<64x64xf32>
    %cst_51 = arith.constant dense<0xFF800000> : vector<64xf32>
    %176 = vector.multi_reduction <maximumf>, %175, %cst_51 [1] : vector<64x64xf32> to vector<64xf32>
    %177 = vector.shape_cast %176 : vector<64xf32> to vector<64x1xf32>
    %178 = vector.broadcast %177 : vector<64x1xf32> to vector<64x64xf32>
    %179 = arith.subf %175, %178 : vector<64x64xf32>
    %180 = math.exp %179 : vector<64x64xf32>
    %cst_52 = arith.constant dense<0.000000e+00> : vector<64xf32>
    %181 = vector.multi_reduction <add>, %180, %cst_52 [1] : vector<64x64xf32> to vector<64xf32>
    %182 = vector.shape_cast %181 : vector<64xf32> to vector<64x1xf32>
    %183 = tpu.reciprocal %182 {approx = true} : vector<64x1xf32> -> vector<64x1xf32>
    %184 = vector.broadcast %183 : vector<64x1xf32> to vector<64x64xf32>
    %185 = arith.mulf %180, %184 : vector<64x64xf32>
    %186 = arith.truncf %185 : vector<64x64xf32> to vector<64x64xbf16>
    %187 = arith.truncf %162 : vector<64x128xf32> to vector<64x128xbf16>
    %cst_53 = arith.constant dense<0.000000e+00> : vector<64x128xf32>
    %188 = tpu.matmul %186, %187, %cst_53 {dimension_numbers = #tpu.dot_dimension_numbers<[1], [0], [0], [1], [0, 0, 1, 1], [], []>} : vector<64x64xbf16>, vector<64x128xbf16>, vector<64x128xf32> -> vector<64x128xf32>
    %189 = arith.addf %188, %163 : vector<64x128xf32>
    %190 = vector.extract_strided_slice %14 {offsets = [4, 0], sizes = [1, 128], strides = [1, 1]} : vector<5x128xf32> to vector<1x128xf32>
    %191 = vector.shape_cast %190 : vector<1x128xf32> to vector<128xf32>
    %192 = vector.shape_cast %191 : vector<128xf32> to vector<1x128xf32>
    %193 = vector.broadcast %192 : vector<1x128xf32> to vector<64x128xf32>
    %194 = arith.addf %189, %193 : vector<64x128xf32>
    %195 = vector.broadcast %16 : f32 to vector<64x128xf32>
    %196 = arith.maximumf %194, %195 : vector<64x128xf32>
    %197 = arith.addf %161, %196 : vector<64x128xf32>
    %cst_54 = arith.constant 2.000000e-01 : f32
    %198 = vector.broadcast %cst_54 : f32 to vector<64x128xf32>
    %199 = arith.mulf %197, %198 : vector<64x128xf32>
    %c0_55 = arith.constant 0 : index
    %c0_56 = arith.constant 0 : index
    %200 = vector.load %arg5[%c0_55, %c0_56] : memref<64x128xf32, #tpu.memory_space<vmem>>, vector<64x128xf32>
    tpu.vector_store %arg5[%c0_55, %c0_56], %199 {strides = array<i32>} : memref<64x128xf32, #tpu.memory_space<vmem>>, vector<64x128xf32>,
    return
  }
  func.func @transform_0(%arg0: i32) -> (i32, i32) {
    %c0_i32 = arith.constant 0 : i32
    %c0_i32_0 = arith.constant 0 : i32
    %c0_i32_1 = arith.constant 0 : i32
    return %c0_i32, %c0_i32_0 : i32, i32
  }
  func.func @transform_1(%arg0: i32) -> (i32, i32, i32) {
    %c0_i32 = arith.constant 0 : i32
    %c0_i32_0 = arith.constant 0 : i32
    %c0_i32_1 = arith.constant 0 : i32
    return %arg0, %c0_i32, %c0_i32_0 : i32, i32, i32
  }
  func.func @transform_2(%arg0: i32) -> (i32, i32, i32) {
    %c0_i32 = arith.constant 0 : i32
    %c0_i32_0 = arith.constant 0 : i32
    %c0_i32_1 = arith.constant 0 : i32
    return %arg0, %c0_i32, %c0_i32_0 : i32, i32, i32
  }
  func.func @transform_3(%arg0: i32) -> (i32, i32, i32) {
    %c0_i32 = arith.constant 0 : i32
    %c0_i32_0 = arith.constant 0 : i32
    %c0_i32_1 = arith.constant 0 : i32
    return %arg0, %c0_i32, %c0_i32_0 : i32, i32, i32
  }
  func.func @transform_4(%arg0: i32) -> (i32, i32) {
    %c0_i32 = arith.constant 0 : i32
    %c0_i32_0 = arith.constant 0 : i32
    %c0_i32_1 = arith.constant 0 : i32
    return %c0_i32, %c0_i32_0 : i32, i32
  }
}

</mosaic_0001>

<llo_original>
// kernel: gcn_pred_forward.1
$region0: #{gcn_pred_forward.1}
  #allocation0 [shape = 'u32[]', space=smem, size = 0x4, offset = 0x4, fixed_abs, tag = 'smem constant byte address 0x4 - core index']
  #allocation1 [shape = 'u32[144,128]{1,0:T(1,128)}', space=vmem, size = 0x12000, scoped, tag = 'internal scratch']
  #allocation2 [shape = 'f32[64,1408]{1,0:T(8,128)}', space=vmem, size = 0x58000, scoped, tag = 'scratch operand']
  %s0 = inlined_call_operand.vmem [shape: f32[64,128], index: 0, kind: input, shape index: {}]
  %s1 = inlined_call_operand.vmem [shape: bf16[3,128,1408], index: 1, kind: input, shape index: {}]
  %s2 = inlined_call_operand.vmem [shape: bf16[3,8,128], index: 2, kind: input, shape index: {}]
  %s3 = inlined_call_operand.vmem [shape: f32[3,5,128], index: 3, kind: input, shape index: {}]
  %s4 = inlined_call_operand.hbm [shape: f32[64,128], index: 4, kind: output, shape index: {}]
  %s5 = sld [smem:[#allocation0]]
  $region53: #{gcn_pred_forward.1} parent=0
    _
  %s7 = ssub.s32 1, %s5
  %s8 = scalar_select 0, %s7, %s5
  $region1: #{gcn_pred_forward.1} parent=0
    #allocation3 [shape = 'u8[32768]{0}', space=vmem, size = 0x8000, scoped, tag = 'output window, operand 0, single buffered']
    #allocation4 [shape = 's32[2]{0}', space=sflag, size = 0x8, scoped, tag = 'scoped memory for gcn_pred_forward.1']
    %9 = vsyncpa [#allocation4], 0
    loop: start=0, step=1, limit=5
    $region2: #{gcn_pred_forward.1} parent=1 // loop_pre_header
      _
    $region3: #{gcn_pred_forward.1} parent=1 // loop_header
      %s11 = sphi 0, %s15
      %p12 = scmp.ge.s32.totalorder %s11, 5
      %s19 = sphi 0, %s19
      %s21 = sphi 0, %s19
      %s22 = sphi 0, %s21
      %s36 = sphi 0, %s22
      %s42 = sphi 0, %s44
      %s45 = sphi 0, %s42
      %s46 = sphi 0, %s45
      %s62 = sphi 0, %s46
      %s68 = sphi 0, %s70
      %s71 = sphi 0, %s68
      %s72 = sphi 0, %s71
      %s88 = sphi 0, %s72
      %s94 = sphi 0, %s96
      %s97 = sphi 0, %s94
      %s98 = sphi 0, %s97
      %s114 = sphi 0, %s98
      %s118 = sphi 0, %s118
      %s120 = sphi 0, %s118
      %s121 = sphi 0, %s120
      %s135 = sphi 0, %s121
    $region4: #{gcn_pred_forward.1} parent=1 // loop_header_branch
      %14 = sbr.rel (%p12) target = $region8
    $region5: #{gcn_pred_forward.1} parent=1 // loop_body
      %s16 = ssub.s32 %s11, 1
      %s17 = ssub.s32 %s11, 2
      %s18 = sadd.s32 %s11, 1
      %s20 = sadd.s32 %s19, 1
      %p23 = scmp.eq.s32.totalorder %s11, 2
      %p24 = scmp.ne.s32.totalorder %s19, %s21
      %p25 = scmp.eq.s32.totalorder %s11, 0
      %p26 = por %p24, %p25
      %p27 = scmp.ne.s32.totalorder %s19, %s21
      %p28 = scmp.eq.s32.totalorder %s16, 2
      %p29 = por %p27, %p28
      %p30 = scmp.ne.s32.totalorder %s21, %s22
      %p31 = scmp.eq.s32.totalorder %s16, 0
      %p32 = por %p30, %p31
      %p33 = scmp.ne.s32.totalorder %s21, %s22
      %p34 = scmp.eq.s32.totalorder %s17, 2
      %p35 = por %p33, %p34
      %p37 = scmp.ne.s32.totalorder %s22, %s36
      %p38 = scmp.eq.s32.totalorder %s17, 0
      %p39 = por %p37, %p38
      %s40 = ssub.s32 %s11, %s18
      %p41 = scmp.eq.s32.totalorder %s40, 0
      %s43 = sadd.s32 %s42, 1
      %s44 = scalar_select %p41, %s42, %s43
      %p47 = pneg %p41
      %p48 = scmp.eq.s32.totalorder %s11, 2
      %p49 = por %p47, %p48
      %p50 = scmp.ne.s32.totalorder %s42, %s45
      %p51 = scmp.eq.s32.totalorder %s11, 0
      %p52 = por %p50, %p51
      %p53 = scmp.ne.s32.totalorder %s42, %s45
      %p54 = scmp.eq.s32.totalorder %s16, 2
      %p55 = por %p53, %p54
      %p56 = scmp.ne.s32.totalorder %s45, %s46
      %p57 = scmp.eq.s32.totalorder %s16, 0
      %p58 = por %p56, %p57
      %p59 = scmp.ne.s32.totalorder %s45, %s46
      %p60 = scmp.eq.s32.totalorder %s17, 2
      %p61 = por %p59, %p60
      %p63 = scmp.ne.s32.totalorder %s46, %s62
      %p64 = scmp.eq.s32.totalorder %s17, 0
      %p65 = por %p63, %p64
      %s66 = ssub.s32 %s11, %s18
      %p67 = scmp.eq.s32.totalorder %s66, 0
      %s69 = sadd.s32 %s68, 1
      %s70 = scalar_select %p67, %s68, %s69
      %p73 = pneg %p67
      %p74 = scmp.eq.s32.totalorder %s11, 2
      %p75 = por %p73, %p74
      %p76 = scmp.ne.s32.totalorder %s68, %s71
      %p77 = scmp.eq.s32.totalorder %s11, 0
      %p78 = por %p76, %p77
      %p79 = scmp.ne.s32.totalorder %s68, %s71
      %p80 = scmp.eq.s32.totalorder %s16, 2
      %p81 = por %p79, %p80
      %p82 = scmp.ne.s32.totalorder %s71, %s72
      %p83 = scmp.eq.s32.totalorder %s16, 0
      %p84 = por %p82, %p83
      %p85 = scmp.ne.s32.totalorder %s71, %s72
      %p86 = scmp.eq.s32.totalorder %s17, 2
      %p87 = por %p85, %p86
      %p89 = scmp.ne.s32.totalorder %s72, %s88
      %p90 = scmp.eq.s32.totalorder %s17, 0
      %p91 = por %p89, %p90
      %s92 = ssub.s32 %s11, %s18
      %p93 = scmp.eq.s32.totalorder %s92, 0
      %s95 = sadd.s32 %s94, 1
      %s96 = scalar_select %p93, %s94, %s95
      %p99 = pneg %p93
      %p100 = scmp.eq.s32.totalorder %s11, 2
      %p101 = por %p99, %p100
      %p102 = scmp.ne.s32.totalorder %s94, %s97
      %p103 = scmp.eq.s32.totalorder %s11, 0
      %p104 = por %p102, %p103
      %p105 = scmp.ne.s32.totalorder %s94, %s97
      %p106 = scmp.eq.s32.totalorder %s16, 2
      %p107 = por %p105, %p106
      %p108 = scmp.ne.s32.totalorder %s97, %s98
      %p109 = scmp.eq.s32.totalorder %s16, 0
      %p110 = por %p108, %p109
      %p111 = scmp.ne.s32.totalorder %s97, %s98
      %p112 = scmp.eq.s32.totalorder %s17, 2
      %p113 = por %p111, %p112
      %p115 = scmp.ne.s32.totalorder %s98, %s114
      %p116 = scmp.eq.s32.totalorder %s17, 0
      %p117 = por %p115, %p116
      %s119 = sadd.s32 %s118, 1
      %p122 = scmp.eq.s32.totalorder %s11, 2
      %p123 = scmp.ne.s32.totalorder %s118, %s120
      %p124 = scmp.eq.s32.totalorder %s11, 0
      %p125 = por %p123, %p124
      %p126 = scmp.ne.s32.totalorder %s118, %s120
      %p127 = scmp.eq.s32.totalorder %s16, 2
      %p128 = por %p126, %p127
      %p129 = scmp.ne.s32.totalorder %s120, %s121
      %p130 = scmp.eq.s32.totalorder %s16, 0
      %p131 = por %p129, %p130
      %p132 = scmp.ne.s32.totalorder %s120, %s121
      %p133 = scmp.eq.s32.totalorder %s17, 2
      %p134 = por %p132, %p133
      %p136 = scmp.ne.s32.totalorder %s121, %s135
      %p137 = scmp.eq.s32.totalorder %s17, 0
      %p138 = por %p136, %p137
      %p139 = scmp.le.s32.totalorder 1, %s11
      %p140 = scmp.lt.s32.totalorder %s11, 4
      %p141 = pnand %p139, %p140
      %p142 = pneg %p141
      // Predicated region
      $region9: #{gcn_pred_forward.1} parent=5 // pred_check
        _
      $region10: #{gcn_pred_forward.1} parent=5 // pred_check_branch
        %144 = sbr.rel (%p141) target = $region12
      $region11: #{gcn_pred_forward.1} parent=5 // pred_region
        %s145 = ssub.s32 %s11, 1
        // Predicated region
        $region13: #{gcn_pred_forward.1} parent=11 // pred_check
          %p146 = pneg %p32
        $region14: #{gcn_pred_forward.1} parent=11 // pred_check_branch
          %148 = sbr.rel (%p146) target = $region16
        $region15: #{gcn_pred_forward.1} parent=11 // pred_region
          _
        $region16: #{gcn_pred_forward.1} parent=11 // pred_fallthru
          _
      $region12: #{gcn_pred_forward.1} parent=5 // pred_fallthru
        _
      %p149 = scmp.lt.s32.totalorder %s11, 3
      // Predicated region
      $region17: #{gcn_pred_forward.1} parent=5 // pred_check
        %p150 = pneg %p149
      $region18: #{gcn_pred_forward.1} parent=5 // pred_check_branch
        %152 = sbr.rel (%p150) target = $region20
      $region19: #{gcn_pred_forward.1} parent=5 // pred_region
        // Predicated region
        $region21: #{gcn_pred_forward.1} parent=19 // pred_check
          %p153 = pneg %p52
        $region22: #{gcn_pred_forward.1} parent=19 // pred_check_branch
          %155 = sbr.rel (%p153) target = $region24
        $region23: #{gcn_pred_forward.1} parent=19 // pred_region
          %p156 = scmp.lt.s32.totalorder %s11, 2
          %s157 = scalar_select %p156, %s11, 2
          %s158 = smul.addr %s157, 176
          %s159 = smul.addr %s158, 4
          %s160 = scalar_lea.vmem %s1, %s159
        $region24: #{gcn_pred_forward.1} parent=19 // pred_fallthru
          _
        // Predicated region
        $region25: #{gcn_pred_forward.1} parent=19 // pred_check
          %p161 = pneg %p78
        $region26: #{gcn_pred_forward.1} parent=19 // pred_check_branch
          %163 = sbr.rel (%p161) target = $region28
        $region27: #{gcn_pred_forward.1} parent=19 // pred_region
          %p164 = scmp.lt.s32.totalorder %s11, 2
          %s165 = scalar_select %p164, %s11, 2
          %s166 = smul.addr %s165, 4
          %s167 = scalar_lea.vmem %s2, %s166
        $region28: #{gcn_pred_forward.1} parent=19 // pred_fallthru
          _
        // Predicated region
        $region29: #{gcn_pred_forward.1} parent=19 // pred_check
          %p168 = pneg %p104
        $region30: #{gcn_pred_forward.1} parent=19 // pred_check_branch
          %170 = sbr.rel (%p168) target = $region32
        $region31: #{gcn_pred_forward.1} parent=19 // pred_region
          %p171 = scmp.lt.s32.totalorder %s11, 2
          %s172 = scalar_select %p171, %s11, 2
          %s173 = smul.addr %s172, 8
          %s174 = scalar_lea.vmem %s3, %s173
        $region32: #{gcn_pred_forward.1} parent=19 // pred_fallthru
          _
      $region20: #{gcn_pred_forward.1} parent=5 // pred_fallthru
        _
      %p175 = scmp.le.s32.totalorder 1, %s11
      %p176 = scmp.lt.s32.totalorder %s11, 4
      %p177 = pnand %p175, %p176
      %p178 = pneg %p177
      // Predicated region
      $region33: #{gcn_pred_forward.1} parent=5 // pred_check
        _
      $region34: #{gcn_pred_forward.1} parent=5 // pred_check_branch
        %180 = sbr.rel (%p177) target = $region36
      $region35: #{gcn_pred_forward.1} parent=5 // pred_region
        %s181 = ssub.s32 %s11, 1
        %p182 = pneg %p32
        %p183 = pneg %p29
        %p184 = scmp.lt.s32.totalorder %s16, 2
        %s185 = scalar_select %p184, %s16, 2
        %s186 = smul.addr %s185, 176
        %s187 = smul.addr %s186, 4
        %s188 = scalar_lea.vmem %s1, %s187
        %p189 = pneg %p58
        %p190 = pneg %p55
        %p191 = scmp.lt.s32.totalorder %s16, 2
        %s192 = scalar_select %p191, %s16, 2
        %s193 = smul.addr %s192, 4
        %s194 = scalar_lea.vmem %s2, %s193
        %p195 = pneg %p84
        %p196 = pneg %p81
        %p197 = scmp.lt.s32.totalorder %s16, 2
        %s198 = scalar_select %p197, %s16, 2
        %s199 = smul.addr %s198, 8
        %s200 = scalar_lea.vmem %s3, %s199
        %p201 = pneg %p110
        %p202 = pneg %p107
        %p203 = pneg %p131
        %p204 = pneg %p128
        %p205 = scmp.lt.s32.totalorder %s16, 2
        %s206 = scalar_select %p205, %s16, 2
        %s207 = smul.addr %s206, 176
        %s208 = smul.addr %s207, 4
        %s209 = scalar_lea.vmem %s1, %s208
        %p210 = scmp.lt.s32.totalorder %s16, 2
        %s211 = scalar_select %p210, %s16, 2
        %s212 = smul.addr %s211, 4
        %s213 = scalar_lea.vmem %s2, %s212
        %p214 = scmp.lt.s32.totalorder %s16, 2
        %s215 = scalar_select %p214, %s16, 2
        %s216 = smul.addr %s215, 8
        %s217 = scalar_lea.vmem %s3, %s216
        %p219 = scmp.eq.s32.totalorder %s16, 0
        // Predicated region
        $region37: #{gcn_pred_forward.1} parent=35 // pred_check
          %p220 = pneg %p219
        $region38: #{gcn_pred_forward.1} parent=35 // pred_check_branch
          %222 = sbr.rel (%p220) target = $region40
        $region39: #{gcn_pred_forward.1} parent=35 // pred_region
          %v223 = vld [vmem:[%s0] sm:$0xff]
          %v224 = vld [vmem:[%s0 + $0x8] sm:$0xff]
          %v225 = vld [vmem:[%s0 + $0x10] sm:$0xff]
          %v226 = vld [vmem:[%s0 + $0x18] sm:$0xff]
          %v227 = vld [vmem:[%s0 + $0x20] sm:$0xff]
          %v228 = vld [vmem:[%s0 + $0x28] sm:$0xff]
          %v229 = vld [vmem:[%s0 + $0x30] sm:$0xff]
          %v230 = vld [vmem:[%s0 + $0x38] sm:$0xff]
          %231 = vst [vmem:[#allocation3] sm:$0xff] %v223
          %232 = vst [vmem:[#allocation3 + $0x8] sm:$0xff] %v224
          %233 = vst [vmem:[#allocation3 + $0x10] sm:$0xff] %v225
          %234 = vst [vmem:[#allocation3 + $0x18] sm:$0xff] %v226
          %235 = vst [vmem:[#allocation3 + $0x20] sm:$0xff] %v227
          %236 = vst [vmem:[#allocation3 + $0x28] sm:$0xff] %v228
          %237 = vst [vmem:[#allocation3 + $0x30] sm:$0xff] %v229
          %238 = vst [vmem:[#allocation3 + $0x38] sm:$0xff] %v230
        $region40: #{gcn_pred_forward.1} parent=35 // pred_fallthru
          _
        %v239 = vld [vmem:[#allocation3] sm:$0xff]
        %v240 = vld [vmem:[#allocation3 + $0x8] sm:$0xff]
        %v241 = vld [vmem:[#allocation3 + $0x10] sm:$0xff]
        %v242 = vld [vmem:[#allocation3 + $0x18] sm:$0xff]
        %v243 = vld [vmem:[#allocation3 + $0x20] sm:$0xff]
        %v244 = vld [vmem:[#allocation3 + $0x28] sm:$0xff]
        %v245 = vld [vmem:[#allocation3 + $0x30] sm:$0xff]
        %v246 = vld [vmem:[#allocation3 + $0x38] sm:$0xff]
        %v247 = vpack.c.bf16 %v240, %v239
        %v248 = vpack.c.bf16 %v242, %v241
        %v249 = vpack.c.bf16 %v244, %v243
        %v250 = vpack.c.bf16 %v246, %v245
        %v251 = vld [vmem:[%s209] sm:$0xff]
        %v252 = vld [vmem:[%s209 + $0x8] sm:$0xff]
        %v253 = vld [vmem:[%s209 + $0x10] sm:$0xff]
        %v254 = vld [vmem:[%s209 + $0x18] sm:$0xff]
        %v255 = vld [vmem:[%s209 + $0x20] sm:$0xff]
        %v256 = vld [vmem:[%s209 + $0x28] sm:$0xf]
        %v257 = vld [vmem:[%s209 + $0x2c] sm:$0xff]
        %v258 = vld [vmem:[%s209 + $0x34] sm:$0xff]
        %v259 = vld [vmem:[%s209 + $0x3c] sm:$0xff]
        %v260 = vld [vmem:[%s209 + $0x44] sm:$0xff]
        %v261 = vld [vmem:[%s209 + $0x4c] sm:$0xff]
        %v262 = vld [vmem:[%s209 + $0x54] sm:$0xf]
        %v263 = vld [vmem:[%s209 + $0x58] sm:$0xff]
        %v264 = vld [vmem:[%s209 + $0x60] sm:$0xff]
        %v265 = vld [vmem:[%s209 + $0x68] sm:$0xff]
        %v266 = vld [vmem:[%s209 + $0x70] sm:$0xff]
        %v267 = vld [vmem:[%s209 + $0x78] sm:$0xff]
        %v268 = vld [vmem:[%s209 + $0x80] sm:$0xf]
        %v269 = vld [vmem:[%s209 + $0x84] sm:$0xff]
        %v270 = vld [vmem:[%s209 + $0x8c] sm:$0xff]
        %v271 = vld [vmem:[%s209 + $0x94] sm:$0xff]
        %v272 = vld [vmem:[%s209 + $0x9c] sm:$0xff]
        %v273 = vld [vmem:[%s209 + $0xa4] sm:$0xff]
        %v274 = vld [vmem:[%s209 + $0xac] sm:$0xf]
        %v275 = vld [vmem:[%s209 + $0xb0] sm:$0xff]
        %v276 = vld [vmem:[%s209 + $0xb8] sm:$0xff]
        %v277 = vld [vmem:[%s209 + $0xc0] sm:$0xff]
        %v278 = vld [vmem:[%s209 + $0xc8] sm:$0xff]
        %v279 = vld [vmem:[%s209 + $0xd0] sm:$0xff]
        %v280 = vld [vmem:[%s209 + $0xd8] sm:$0xf]
        %v281 = vld [vmem:[%s209 + $0xdc] sm:$0xff]
        %v282 = vld [vmem:[%s209 + $0xe4] sm:$0xff]
        %v283 = vld [vmem:[%s209 + $0xec] sm:$0xff]
        %v284 = vld [vmem:[%s209 + $0xf4] sm:$0xff]
        %v285 = vld [vmem:[%s209 + $0xfc] sm:$0xff]
        %v286 = vld [vmem:[%s209 + $0x104] sm:$0xf]
        %v287 = vld [vmem:[%s209 + $0x108] sm:$0xff]
        %v288 = vld [vmem:[%s209 + $0x110] sm:$0xff]
        %v289 = vld [vmem:[%s209 + $0x118] sm:$0xff]
        %v290 = vld [vmem:[%s209 + $0x120] sm:$0xff]
        %v291 = vld [vmem:[%s209 + $0x128] sm:$0xff]
        %v292 = vld [vmem:[%s209 + $0x130] sm:$0xf]
        %v293 = vld [vmem:[%s209 + $0x134] sm:$0xff]
        %v294 = vld [vmem:[%s209 + $0x13c] sm:$0xff]
        %v295 = vld [vmem:[%s209 + $0x144] sm:$0xff]
        %v296 = vld [vmem:[%s209 + $0x14c] sm:$0xff]
        %v297 = vld [vmem:[%s209 + $0x154] sm:$0xff]
        %v298 = vld [vmem:[%s209 + $0x15c] sm:$0xf]
        %v299 = vld [vmem:[%s209 + $0x160] sm:$0xff]
        %v300 = vld [vmem:[%s209 + $0x168] sm:$0xff]
        %v301 = vld [vmem:[%s209 + $0x170] sm:$0xff]
        %v302 = vld [vmem:[%s209 + $0x178] sm:$0xff]
        %v303 = vld [vmem:[%s209 + $0x180] sm:$0xff]
        %v304 = vld [vmem:[%s209 + $0x188] sm:$0xf]
        %v305 = vld [vmem:[%s209 + $0x18c] sm:$0xff]
        %v306 = vld [vmem:[%s209 + $0x194] sm:$0xff]
        %v307 = vld [vmem:[%s209 + $0x19c] sm:$0xff]
        %v308 = vld [vmem:[%s209 + $0x1a4] sm:$0xff]
        %v309 = vld [vmem:[%s209 + $0x1ac] sm:$0xff]
        %v310 = vld [vmem:[%s209 + $0x1b4] sm:$0xf]
        %v311 = vld [vmem:[%s209 + $0x1b8] sm:$0xff]
        %v312 = vld [vmem:[%s209 + $0x1c0] sm:$0xff]
        %v313 = vld [vmem:[%s209 + $0x1c8] sm:$0xff]
        %v314 = vld [vmem:[%s209 + $0x1d0] sm:$0xff]
        %v315 = vld [vmem:[%s209 + $0x1d8] sm:$0xff]
        %v316 = vld [vmem:[%s209 + $0x1e0] sm:$0xf]
        %v317 = vld [vmem:[%s209 + $0x1e4] sm:$0xff]
        %v318 = vld [vmem:[%s209 + $0x1ec] sm:$0xff]
        %v319 = vld [vmem:[%s209 + $0x1f4] sm:$0xff]
        %v320 = vld [vmem:[%s209 + $0x1fc] sm:$0xff]
        %v321 = vld [vmem:[%s209 + $0x204] sm:$0xff]
        %v322 = vld [vmem:[%s209 + $0x20c] sm:$0xf]
        %v323 = vld [vmem:[%s209 + $0x210] sm:$0xff]
        %v324 = vld [vmem:[%s209 + $0x218] sm:$0xff]
        %v325 = vld [vmem:[%s209 + $0x220] sm:$0xff]
        %v326 = vld [vmem:[%s209 + $0x228] sm:$0xff]
        %v327 = vld [vmem:[%s209 + $0x230] sm:$0xff]
        %v328 = vld [vmem:[%s209 + $0x238] sm:$0xf]
        %v329 = vld [vmem:[%s209 + $0x23c] sm:$0xff]
        %v330 = vld [vmem:[%s209 + $0x244] sm:$0xff]
        %v331 = vld [vmem:[%s209 + $0x24c] sm:$0xff]
        %v332 = vld [vmem:[%s209 + $0x254] sm:$0xff]
        %v333 = vld [vmem:[%s209 + $0x25c] sm:$0xff]
        %v334 = vld [vmem:[%s209 + $0x264] sm:$0xf]
        %v335 = vld [vmem:[%s209 + $0x268] sm:$0xff]
        %v336 = vld [vmem:[%s209 + $0x270] sm:$0xff]
        %v337 = vld [vmem:[%s209 + $0x278] sm:$0xff]
        %v338 = vld [vmem:[%s209 + $0x280] sm:$0xff]
        %v339 = vld [vmem:[%s209 + $0x288] sm:$0xff]
        %v340 = vld [vmem:[%s209 + $0x290] sm:$0xf]
        %v341 = vld [vmem:[%s209 + $0x294] sm:$0xff]
        %v342 = vld [vmem:[%s209 + $0x29c] sm:$0xff]
        %v343 = vld [vmem:[%s209 + $0x2a4] sm:$0xff]
        %v344 = vld [vmem:[%s209 + $0x2ac] sm:$0xff]
        %v345 = vld [vmem:[%s209 + $0x2b4] sm:$0xff]
        %v346 = vld [vmem:[%s209 + $0x2bc] sm:$0xf]
        %v443 = vunpack.c.l.b16 %v251
        %v444 = vunpack.c.h.b16 %v251
        %v445 = vunpack.c.l.b16 %v252
        %v446 = vunpack.c.h.b16 %v252
        %v447 = vunpack.c.l.b16 %v253
        %v448 = vunpack.c.h.b16 %v253
        %v449 = vunpack.c.l.b16 %v254
        %v450 = vunpack.c.h.b16 %v254
        %v451 = vunpack.c.l.b16 %v255
        %v452 = vunpack.c.h.b16 %v255
        %v453 = vunpack.c.l.b16 %v256
        %v454 = vunpack.c.l.b16 %v257
        %v455 = vunpack.c.h.b16 %v257
        %v456 = vunpack.c.l.b16 %v258
        %v457 = vunpack.c.h.b16 %v258
        %v458 = vunpack.c.l.b16 %v259
        %v459 = vunpack.c.h.b16 %v259
        %v460 = vunpack.c.l.b16 %v260
        %v461 = vunpack.c.h.b16 %v260
        %v462 = vunpack.c.l.b16 %v261
        %v463 = vunpack.c.h.b16 %v261
        %v464 = vunpack.c.l.b16 %v262
        %v465 = vunpack.c.l.b16 %v263
        %v466 = vunpack.c.h.b16 %v263
        %v467 = vunpack.c.l.b16 %v264
        %v468 = vunpack.c.h.b16 %v264
        %v469 = vunpack.c.l.b16 %v265
        %v470 = vunpack.c.h.b16 %v265
        %v471 = vunpack.c.l.b16 %v266
        %v472 = vunpack.c.h.b16 %v266
        %v473 = vunpack.c.l.b16 %v267
        %v474 = vunpack.c.h.b16 %v267
        %v475 = vunpack.c.l.b16 %v268
        %v476 = vunpack.c.l.b16 %v269
        %v477 = vunpack.c.h.b16 %v269
        %v478 = vunpack.c.l.b16 %v270
        %v479 = vunpack.c.h.b16 %v270
        %v480 = vunpack.c.l.b16 %v271
        %v481 = vunpack.c.h.b16 %v271
        %v482 = vunpack.c.l.b16 %v272
        %v483 = vunpack.c.h.b16 %v272
        %v484 = vunpack.c.l.b16 %v273
        %v485 = vunpack.c.h.b16 %v273
        %v486 = vunpack.c.l.b16 %v274
        %v487 = vunpack.c.l.b16 %v275
        %v488 = vunpack.c.h.b16 %v275
        %v489 = vunpack.c.l.b16 %v276
        %v490 = vunpack.c.h.b16 %v276
        %v491 = vunpack.c.l.b16 %v277
        %v492 = vunpack.c.h.b16 %v277
        %v493 = vunpack.c.l.b16 %v278
        %v494 = vunpack.c.h.b16 %v278
        %v495 = vunpack.c.l.b16 %v279
        %v496 = vunpack.c.h.b16 %v279
        %v497 = vunpack.c.l.b16 %v280
        %v498 = vunpack.c.l.b16 %v281
        %v499 = vunpack.c.h.b16 %v281
        %v500 = vunpack.c.l.b16 %v282
        %v501 = vunpack.c.h.b16 %v282
        %v502 = vunpack.c.l.b16 %v283
        %v503 = vunpack.c.h.b16 %v283
        %v504 = vunpack.c.l.b16 %v284
        %v505 = vunpack.c.h.b16 %v284
        %v506 = vunpack.c.l.b16 %v285
        %v507 = vunpack.c.h.b16 %v285
        %v508 = vunpack.c.l.b16 %v286
        %v509 = vunpack.c.l.b16 %v287
        %v510 = vunpack.c.h.b16 %v287
        %v511 = vunpack.c.l.b16 %v288
        %v512 = vunpack.c.h.b16 %v288
        %v513 = vunpack.c.l.b16 %v289
        %v514 = vunpack.c.h.b16 %v289
        %v515 = vunpack.c.l.b16 %v290
        %v516 = vunpack.c.h.b16 %v290
        %v517 = vunpack.c.l.b16 %v291
        %v518 = vunpack.c.h.b16 %v291
        %v519 = vunpack.c.l.b16 %v292
        %v520 = vunpack.c.l.b16 %v293
        %v521 = vunpack.c.h.b16 %v293
        %v522 = vunpack.c.l.b16 %v294
        %v523 = vunpack.c.h.b16 %v294
        %v524 = vunpack.c.l.b16 %v295
        %v525 = vunpack.c.h.b16 %v295
        %v526 = vunpack.c.l.b16 %v296
        %v527 = vunpack.c.h.b16 %v296
        %v528 = vunpack.c.l.b16 %v297
        %v529 = vunpack.c.h.b16 %v297
        %v530 = vunpack.c.l.b16 %v298
        %v531 = vunpack.c.l.b16 %v299
        %v532 = vunpack.c.h.b16 %v299
        %v533 = vunpack.c.l.b16 %v300
        %v534 = vunpack.c.h.b16 %v300
        %v535 = vunpack.c.l.b16 %v301
        %v536 = vunpack.c.h.b16 %v301
        %v537 = vunpack.c.l.b16 %v302
        %v538 = vunpack.c.h.b16 %v302
        %v539 = vunpack.c.l.b16 %v303
        %v540 = vunpack.c.h.b16 %v303
        %v541 = vunpack.c.l.b16 %v304
        %v542 = vunpack.c.l.b16 %v305
        %v543 = vunpack.c.h.b16 %v305
        %v544 = vunpack.c.l.b16 %v306
        %v545 = vunpack.c.h.b16 %v306
        %v546 = vunpack.c.l.b16 %v307
        %v547 = vunpack.c.h.b16 %v307
        %v548 = vunpack.c.l.b16 %v308
        %v549 = vunpack.c.h.b16 %v308
        %v550 = vunpack.c.l.b16 %v309
        %v551 = vunpack.c.h.b16 %v309
        %v552 = vunpack.c.l.b16 %v310
        %v553 = vunpack.c.l.b16 %v311
        %v554 = vunpack.c.h.b16 %v311
        %v555 = vunpack.c.l.b16 %v312
        %v556 = vunpack.c.h.b16 %v312
        %v557 = vunpack.c.l.b16 %v313
        %v558 = vunpack.c.h.b16 %v313
        %v559 = vunpack.c.l.b16 %v314
        %v560 = vunpack.c.h.b16 %v314
        %v561 = vunpack.c.l.b16 %v315
        %v562 = vunpack.c.h.b16 %v315
        %v563 = vunpack.c.l.b16 %v316
        %v564 = vunpack.c.l.b16 %v317
        %v565 = vunpack.c.h.b16 %v317
        %v566 = vunpack.c.l.b16 %v318
        %v567 = vunpack.c.h.b16 %v318
        %v568 = vunpack.c.l.b16 %v319
        %v569 = vunpack.c.h.b16 %v319
        %v570 = vunpack.c.l.b16 %v320
        %v571 = vunpack.c.h.b16 %v320
        %v572 = vunpack.c.l.b16 %v321
        %v573 = vunpack.c.h.b16 %v321
        %v574 = vunpack.c.l.b16 %v322
        %v575 = vunpack.c.l.b16 %v323
        %v576 = vunpack.c.h.b16 %v323
        %v577 = vunpack.c.l.b16 %v324
        %v578 = vunpack.c.h.b16 %v324
        %v579 = vunpack.c.l.b16 %v325
        %v580 = vunpack.c.h.b16 %v325
        %v581 = vunpack.c.l.b16 %v326
        %v582 = vunpack.c.h.b16 %v326
        %v583 = vunpack.c.l.b16 %v327
        %v584 = vunpack.c.h.b16 %v327
        %v585 = vunpack.c.l.b16 %v328
        %v586 = vunpack.c.l.b16 %v329
        %v587 = vunpack.c.h.b16 %v329
        %v588 = vunpack.c.l.b16 %v330
        %v589 = vunpack.c.h.b16 %v330
        %v590 = vunpack.c.l.b16 %v331
        %v591 = vunpack.c.h.b16 %v331
        %v592 = vunpack.c.l.b16 %v332
        %v593 = vunpack.c.h.b16 %v332
        %v594 = vunpack.c.l.b16 %v333
        %v595 = vunpack.c.h.b16 %v333
        %v596 = vunpack.c.l.b16 %v334
        %v597 = vunpack.c.l.b16 %v335
        %v598 = vunpack.c.h.b16 %v335
        %v599 = vunpack.c.l.b16 %v336
        %v600 = vunpack.c.h.b16 %v336
        %v601 = vunpack.c.l.b16 %v337
        %v602 = vunpack.c.h.b16 %v337
        %v603 = vunpack.c.l.b16 %v338
        %v604 = vunpack.c.h.b16 %v338
        %v605 = vunpack.c.l.b16 %v339
        %v606 = vunpack.c.h.b16 %v339
        %v607 = vunpack.c.l.b16 %v340
        %v608 = vunpack.c.l.b16 %v341
        %v609 = vunpack.c.h.b16 %v341
        %v610 = vunpack.c.l.b16 %v342
        %v611 = vunpack.c.h.b16 %v342
        %v612 = vunpack.c.l.b16 %v343
        %v613 = vunpack.c.h.b16 %v343
        %v614 = vunpack.c.l.b16 %v344
        %v615 = vunpack.c.h.b16 %v344
        %v616 = vunpack.c.l.b16 %v345
        %v617 = vunpack.c.h.b16 %v345
        %v618 = vunpack.c.l.b16 %v346
        %v619 = vpack.c.b16 %v454, %v443
        %v620 = vpack.c.b16 %v455, %v444
        %v621 = vpack.c.b16 %v456, %v445
        %v622 = vpack.c.b16 %v457, %v446
        %v623 = vpack.c.b16 %v458, %v447
        %v624 = vpack.c.b16 %v459, %v448
        %v625 = vpack.c.b16 %v460, %v449
        %v626 = vpack.c.b16 %v461, %v450
        %v627 = vpack.c.b16 %v462, %v451
        %v628 = vpack.c.b16 %v463, %v452
        %v629 = vpack.c.b16 %v464, %v453
        %v630 = vpack.c.b16 %v476, %v465
        %v631 = vpack.c.b16 %v477, %v466
        %v632 = vpack.c.b16 %v478, %v467
        %v633 = vpack.c.b16 %v479, %v468
        %v634 = vpack.c.b16 %v480, %v469
        %v635 = vpack.c.b16 %v481, %v470
        %v636 = vpack.c.b16 %v482, %v471
        %v637 = vpack.c.b16 %v483, %v472
        %v638 = vpack.c.b16 %v484, %v473
        %v639 = vpack.c.b16 %v485, %v474
        %v640 = vpack.c.b16 %v486, %v475
        %v641 = vpack.c.b16 %v498, %v487
        %v642 = vpack.c.b16 %v499, %v488
        %v643 = vpack.c.b16 %v500, %v489
        %v644 = vpack.c.b16 %v501, %v490
        %v645 = vpack.c.b16 %v502, %v491
        %v646 = vpack.c.b16 %v503, %v492
        %v647 = vpack.c.b16 %v504, %v493
        %v648 = vpack.c.b16 %v505, %v494
        %v649 = vpack.c.b16 %v506, %v495
        %v650 = vpack.c.b16 %v507, %v496
        %v651 = vpack.c.b16 %v508, %v497
        %v652 = vpack.c.b16 %v520, %v509
        %v653 = vpack.c.b16 %v521, %v510
        %v654 = vpack.c.b16 %v522, %v511
        %v655 = vpack.c.b16 %v523, %v512
        %v656 = vpack.c.b16 %v524, %v513
        %v657 = vpack.c.b16 %v525, %v514
        %v658 = vpack.c.b16 %v526, %v515
        %v659 = vpack.c.b16 %v527, %v516
        %v660 = vpack.c.b16 %v528, %v517
        %v661 = vpack.c.b16 %v529, %v518
        %v662 = vpack.c.b16 %v530, %v519
        %v663 = vpack.c.b16 %v542, %v531
        %v664 = vpack.c.b16 %v543, %v532
        %v665 = vpack.c.b16 %v544, %v533
        %v666 = vpack.c.b16 %v545, %v534
        %v667 = vpack.c.b16 %v546, %v535
        %v668 = vpack.c.b16 %v547, %v536
        %v669 = vpack.c.b16 %v548, %v537
        %v670 = vpack.c.b16 %v549, %v538
        %v671 = vpack.c.b16 %v550, %v539
        %v672 = vpack.c.b16 %v551, %v540
        %v673 = vpack.c.b16 %v552, %v541
        %v674 = vpack.c.b16 %v564, %v553
        %v675 = vpack.c.b16 %v565, %v554
        %v676 = vpack.c.b16 %v566, %v555
        %v677 = vpack.c.b16 %v567, %v556
        %v678 = vpack.c.b16 %v568, %v557
        %v679 = vpack.c.b16 %v569, %v558
        %v680 = vpack.c.b16 %v570, %v559
        %v681 = vpack.c.b16 %v571, %v560
        %v682 = vpack.c.b16 %v572, %v561
        %v683 = vpack.c.b16 %v573, %v562
        %v684 = vpack.c.b16 %v574, %v563
        %v685 = vpack.c.b16 %v586, %v575
        %v686 = vpack.c.b16 %v587, %v576
        %v687 = vpack.c.b16 %v588, %v577
        %v688 = vpack.c.b16 %v589, %v578
        %v689 = vpack.c.b16 %v590, %v579
        %v690 = vpack.c.b16 %v591, %v580
        %v691 = vpack.c.b16 %v592, %v581
        %v692 = vpack.c.b16 %v593, %v582
        %v693 = vpack.c.b16 %v594, %v583
        %v694 = vpack.c.b16 %v595, %v584
        %v695 = vpack.c.b16 %v596, %v585
        %v696 = vpack.c.b16 %v608, %v597
        %v697 = vpack.c.b16 %v609, %v598
        %v698 = vpack.c.b16 %v610, %v599
        %v699 = vpack.c.b16 %v611, %v600
        %v700 = vpack.c.b16 %v612, %v601
        %v701 = vpack.c.b16 %v613, %v602
        %v702 = vpack.c.b16 %v614, %v603
        %v703 = vpack.c.b16 %v615, %v604
        %v704 = vpack.c.b16 %v616, %v605
        %v705 = vpack.c.b16 %v617, %v606
        %v706 = vpack.c.b16 %v618, %v607
        %795 = vmatprep.subr.bf16.mxu0 %v697
        %796 = vmatpush1.bf16.msra.mxu0 %v696
        %797 = vmatprep.subr.bf16.mxu0 %v686
        %798 = vmatpush1.bf16.msra.mxu0 %v685
        %799 = vmatprep.subr.bf16.mxu0 %v675
        %800 = vmatpush1.bf16.msra.mxu0 %v674
        %801 = vmatprep.subr.bf16.mxu0 %v664
        %802 = vmatpush1.bf16.msra.mxu0 %v663
        %803 = vmatprep.subr.bf16.mxu0 %v653
        %804 = vmatpush1.bf16.msra.mxu0 %v652
        %805 = vmatprep.subr.bf16.mxu0 %v642
        %806 = vmatpush1.bf16.msra.mxu0 %v641
        %807 = vmatprep.subr.bf16.mxu0 %v631
        %808 = vmatpush1.bf16.msra.mxu0 %v630
        %809 = vmatprep.subr.bf16.mxu0 %v620
        %810 = vmatpush1.bf16.msra.mxu0 %v619
        %811 = vmatprep.subr.bf16.mxu0 0
        %812 = vmatpush2.bf16.msra.mxu0 0
        %813 = vmatprep.subr.bf16.mxu0 0
        %814 = vmatpush2.bf16.msra.mxu0 0
        %815 = vmatprep.subr.bf16.mxu0 0
        %816 = vmatpush2.bf16.msra.mxu0 0
        %817 = vmatprep.subr.bf16.mxu0 0
        %818 = vmatpush2.bf16.msra.mxu0 0
        %819 = vmatprep.subr.bf16.mxu0 0
        %820 = vmatpush2.bf16.msra.mxu0 0
        %821 = vmatprep.subr.bf16.mxu0 0
        %822 = vmatpush2.bf16.msra.mxu0 0
        %823 = vmatprep.subr.bf16.mxu0 0
        %824 = vmatpush2.bf16.msra.mxu0 0
        %825 = vmatprep.subr.bf16.mxu0 0
        %826 = vmatpush2.bf16.msra.mxu0 0
        %827 = vmatprep.mubr.bf16.mxu0 0
        %828 = vmatmul.mubr.bf16.gmra.mxu0 %v247
        %v829 = vpop.f32.mrf.mxu0
        %v830 = vadd.f32 0.0, %v829
        %v831 = vpop.f32.mrf.mxu0
        %v832 = vadd.f32 0.0, %v831
        %v833 = vpop.f32.mrf.mxu0
        %v834 = vadd.f32 0.0, %v833
        %v835 = vpop.f32.mrf.mxu0
        %v836 = vadd.f32 0.0, %v835
        %837 = vmatprep.mubr.bf16.mxu0 0
        %838 = vmatmul.mubr.bf16.gmra.mxu0 %v248
        %v839 = vpop.f32.mrf.mxu0
        %v840 = vadd.f32 0.0, %v839
        %v841 = vpop.f32.mrf.mxu0
        %v842 = vadd.f32 0.0, %v841
        %v843 = vpop.f32.mrf.mxu0
        %v844 = vadd.f32 0.0, %v843
        %v845 = vpop.f32.mrf.mxu0
        %v846 = vadd.f32 0.0, %v845
        %847 = vmatprep.mubr.bf16.mxu0 0
        %848 = vmatmul.mubr.bf16.gmra.mxu0 %v249
        %v849 = vpop.f32.mrf.mxu0
        %v850 = vadd.f32 0.0, %v849
        %v851 = vpop.f32.mrf.mxu0
        %v852 = vadd.f32 0.0, %v851
        %v853 = vpop.f32.mrf.mxu0
        %v854 = vadd.f32 0.0, %v853
        %v855 = vpop.f32.mrf.mxu0
        %v856 = vadd.f32 0.0, %v855
        %857 = vmatprep.mubr.bf16.mxu0 0
        %858 = vmatmul.mubr.bf16.gmra.mxu0 %v250
        %v859 = vpop.f32.mrf.mxu0
        %v860 = vadd.f32 0.0, %v859
        %v861 = vpop.f32.mrf.mxu0
        %v862 = vadd.f32 0.0, %v861
        %v863 = vpop.f32.mrf.mxu0
        %v864 = vadd.f32 0.0, %v863
        %v865 = vpop.f32.mrf.mxu0
        %v866 = vadd.f32 0.0, %v865
        %867 = vdwg.mxu0
        %868 = vmatprep.subr.bf16.mxu0 %v699
        %869 = vmatpush1.bf16.msra.mxu0 %v698
        %870 = vmatprep.subr.bf16.mxu0 %v688
        %871 = vmatpush1.bf16.msra.mxu0 %v687
        %872 = vmatprep.subr.bf16.mxu0 %v677
        %873 = vmatpush1.bf16.msra.mxu0 %v676
        %874 = vmatprep.subr.bf16.mxu0 %v666
        %875 = vmatpush1.bf16.msra.mxu0 %v665
        %876 = vmatprep.subr.bf16.mxu0 %v655
        %877 = vmatpush1.bf16.msra.mxu0 %v654
        %878 = vmatprep.subr.bf16.mxu0 %v644
        %879 = vmatpush1.bf16.msra.mxu0 %v643
        %880 = vmatprep.subr.bf16.mxu0 %v633
        %881 = vmatpush1.bf16.msra.mxu0 %v632
        %882 = vmatprep.subr.bf16.mxu0 %v622
        %883 = vmatpush1.bf16.msra.mxu0 %v621
        %884 = vmatprep.subr.bf16.mxu0 0
        %885 = vmatpush2.bf16.msra.mxu0 0
        %886 = vmatprep.subr.bf16.mxu0 0
        %887 = vmatpush2.bf16.msra.mxu0 0
        %888 = vmatprep.subr.bf16.mxu0 0
        %889 = vmatpush2.bf16.msra.mxu0 0
        %890 = vmatprep.subr.bf16.mxu0 0
        %891 = vmatpush2.bf16.msra.mxu0 0
        %892 = vmatprep.subr.bf16.mxu0 0
        %893 = vmatpush2.bf16.msra.mxu0 0
        %894 = vmatprep.subr.bf16.mxu0 0
        %895 = vmatpush2.bf16.msra.mxu0 0
        %896 = vmatprep.subr.bf16.mxu0 0
        %897 = vmatpush2.bf16.msra.mxu0 0
        %898 = vmatprep.subr.bf16.mxu0 0
        %899 = vmatpush2.bf16.msra.mxu0 0
        %900 = vmatprep.mubr.bf16.mxu0 0
        %901 = vmatmul.mubr.bf16.gmra.mxu0 %v247
        %v902 = vpop.f32.mrf.mxu0
        %v903 = vadd.f32 0.0, %v902
        %v904 = vpop.f32.mrf.mxu0
        %v905 = vadd.f32 0.0, %v904
        %v906 = vpop.f32.mrf.mxu0
        %v907 = vadd.f32 0.0, %v906
        %v908 = vpop.f32.mrf.mxu0
        %v909 = vadd.f32 0.0, %v908
        %910 = vmatprep.mubr.bf16.mxu0 0
        %911 = vmatmul.mubr.bf16.gmra.mxu0 %v248
        %v912 = vpop.f32.mrf.mxu0
        %v913 = vadd.f32 0.0, %v912
        %v914 = vpop.f32.mrf.mxu0
        %v915 = vadd.f32 0.0, %v914
        %v916 = vpop.f32.mrf.mxu0
        %v917 = vadd.f32 0.0, %v916
        %v918 = vpop.f32.mrf.mxu0
        %v919 = vadd.f32 0.0, %v918
        %920 = vmatprep.mubr.bf16.mxu0 0
        %921 = vmatmul.mubr.bf16.gmra.mxu0 %v249
        %v922 = vpop.f32.mrf.mxu0
        %v923 = vadd.f32 0.0, %v922
        %v924 = vpop.f32.mrf.mxu0
        %v925 = vadd.f32 0.0, %v924
        %v926 = vpop.f32.mrf.mxu0
        %v927 = vadd.f32 0.0, %v926
        %v928 = vpop.f32.mrf.mxu0
        %v929 = vadd.f32 0.0, %v928
        %930 = vmatprep.mubr.bf16.mxu0 0
        %931 = vmatmul.mubr.bf16.gmra.mxu0 %v250
        %v932 = vpop.f32.mrf.mxu0
        %v933 = vadd.f32 0.0, %v932
        %v934 = vpop.f32.mrf.mxu0
        %v935 = vadd.f32 0.0, %v934
        %v936 = vpop.f32.mrf.mxu0
        %v937 = vadd.f32 0.0, %v936
        %v938 = vpop.f32.mrf.mxu0
        %v939 = vadd.f32 0.0, %v938
        %940 = vdwg.mxu0
        %941 = vmatprep.subr.bf16.mxu0 %v701
        %942 = vmatpush1.bf16.msra.mxu0 %v700
        %943 = vmatprep.subr.bf16.mxu0 %v690
        %944 = vmatpush1.bf16.msra.mxu0 %v689
        %945 = vmatprep.subr.bf16.mxu0 %v679
        %946 = vmatpush1.bf16.msra.mxu0 %v678
        %947 = vmatprep.subr.bf16.mxu0 %v668
        %948 = vmatpush1.bf16.msra.mxu0 %v667
        %949 = vmatprep.subr.bf16.mxu0 %v657
        %950 = vmatpush1.bf16.msra.mxu0 %v656
        %951 = vmatprep.subr.bf16.mxu0 %v646
        %952 = vmatpush1.bf16.msra.mxu0 %v645
        %953 = vmatprep.subr.bf16.mxu0 %v635
        %954 = vmatpush1.bf16.msra.mxu0 %v634
        %955 = vmatprep.subr.bf16.mxu0 %v624
        %956 = vmatpush1.bf16.msra.mxu0 %v623
        %957 = vmatprep.subr.bf16.mxu0 0
        %958 = vmatpush2.bf16.msra.mxu0 0
        %959 = vmatprep.subr.bf16.mxu0 0
        %960 = vmatpush2.bf16.msra.mxu0 0
        %961 = vmatprep.subr.bf16.mxu0 0
        %962 = vmatpush2.bf16.msra.mxu0 0
        %963 = vmatprep.subr.bf16.mxu0 0
        %964 = vmatpush2.bf16.msra.mxu0 0
        %965 = vmatprep.subr.bf16.mxu0 0
        %966 = vmatpush2.bf16.msra.mxu0 0
        %967 = vmatprep.subr.bf16.mxu0 0
        %968 = vmatpush2.bf16.msra.mxu0 0
        %969 = vmatprep.subr.bf16.mxu0 0
        %970 = vmatpush2.bf16.msra.mxu0 0
        %971 = vmatprep.subr.bf16.mxu0 0
        %972 = vmatpush2.bf16.msra.mxu0 0
        %973 = vmatprep.mubr.bf16.mxu0 0
        %974 = vmatmul.mubr.bf16.gmra.mxu0 %v247
        %v975 = vpop.f32.mrf.mxu0
        %v976 = vadd.f32 0.0, %v975
        %v977 = vpop.f32.mrf.mxu0
        %v978 = vadd.f32 0.0, %v977
        %v979 = vpop.f32.mrf.mxu0
        %v980 = vadd.f32 0.0, %v979
        %v981 = vpop.f32.mrf.mxu0
        %v982 = vadd.f32 0.0, %v981
        %983 = vmatprep.mubr.bf16.mxu0 0
        %984 = vmatmul.mubr.bf16.gmra.mxu0 %v248
        %v985 = vpop.f32.mrf.mxu0
        %v986 = vadd.f32 0.0, %v985
        %v987 = vpop.f32.mrf.mxu0
        %v988 = vadd.f32 0.0, %v987
        %v989 = vpop.f32.mrf.mxu0
        %v990 = vadd.f32 0.0, %v989
        %v991 = vpop.f32.mrf.mxu0
        %v992 = vadd.f32 0.0, %v991
        %993 = vmatprep.mubr.bf16.mxu0 0
        %994 = vmatmul.mubr.bf16.gmra.mxu0 %v249
        %v995 = vpop.f32.mrf.mxu0
        %v996 = vadd.f32 0.0, %v995
        %v997 = vpop.f32.mrf.mxu0
        %v998 = vadd.f32 0.0, %v997
        %v999 = vpop.f32.mrf.mxu0
        %v1000 = vadd.f32 0.0, %v999
        %v1001 = vpop.f32.mrf.mxu0
        %v1002 = vadd.f32 0.0, %v1001
        %1003 = vmatprep.mubr.bf16.mxu0 0
        %1004 = vmatmul.mubr.bf16.gmra.mxu0 %v250
        %v1005 = vpop.f32.mrf.mxu0
        %v1006 = vadd.f32 0.0, %v1005
        %v1007 = vpop.f32.mrf.mxu0
        %v1008 = vadd.f32 0.0, %v1007
        %v1009 = vpop.f32.mrf.mxu0
        %v1010 = vadd.f32 0.0, %v1009
        %v1011 = vpop.f32.mrf.mxu0
        %v1012 = vadd.f32 0.0, %v1011
        %1013 = vdwg.mxu0
        %1014 = vmatprep.subr.bf16.mxu0 %v703
        %1015 = vmatpush1.bf16.msra.mxu0 %v702
        %1016 = vmatprep.subr.bf16.mxu0 %v692
        %1017 = vmatpush1.bf16.msra.mxu0 %v691
        %1018 = vmatprep.subr.bf16.mxu0 %v681
        %1019 = vmatpush1.bf16.msra.mxu0 %v680
        %1020 = vmatprep.subr.bf16.mxu0 %v670
        %1021 = vmatpush1.bf16.msra.mxu0 %v669
        %1022 = vmatprep.subr.bf16.mxu0 %v659
        %1023 = vmatpush1.bf16.msra.mxu0 %v658
        %1024 = vmatprep.subr.bf16.mxu0 %v648
        %1025 = vmatpush1.bf16.msra.mxu0 %v647
        %1026 = vmatprep.subr.bf16.mxu0 %v637
        %1027 = vmatpush1.bf16.msra.mxu0 %v636
        %1028 = vmatprep.subr.bf16.mxu0 %v626
        %1029 = vmatpush1.bf16.msra.mxu0 %v625
        %1030 = vmatprep.subr.bf16.mxu0 0
        %1031 = vmatpush2.bf16.msra.mxu0 0
        %1032 = vmatprep.subr.bf16.mxu0 0
        %1033 = vmatpush2.bf16.msra.mxu0 0
        %1034 = vmatprep.subr.bf16.mxu0 0
        %1035 = vmatpush2.bf16.msra.mxu0 0
        %1036 = vmatprep.subr.bf16.mxu0 0
        %1037 = vmatpush2.bf16.msra.mxu0 0
        %1038 = vmatprep.subr.bf16.mxu0 0
        %1039 = vmatpush2.bf16.msra.mxu0 0
        %1040 = vmatprep.subr.bf16.mxu0 0
        %1041 = vmatpush2.bf16.msra.mxu0 0
        %1042 = vmatprep.subr.bf16.mxu0 0
        %1043 = vmatpush2.bf16.msra.mxu0 0
        %1044 = vmatprep.subr.bf16.mxu0 0
        %1045 = vmatpush2.bf16.msra.mxu0 0
        %1046 = vmatprep.mubr.bf16.mxu0 0
        %1047 = vmatmul.mubr.bf16.gmra.mxu0 %v247
        %v1048 = vpop.f32.mrf.mxu0
        %v1049 = vadd.f32 0.0, %v1048
        %v1050 = vpop.f32.mrf.mxu0
        %v1051 = vadd.f32 0.0, %v1050
        %v1052 = vpop.f32.mrf.mxu0
        %v1053 = vadd.f32 0.0, %v1052
        %v1054 = vpop.f32.mrf.mxu0
        %v1055 = vadd.f32 0.0, %v1054
        %1056 = vmatprep.mubr.bf16.mxu0 0
        %1057 = vmatmul.mubr.bf16.gmra.mxu0 %v248
        %v1058 = vpop.f32.mrf.mxu0
        %v1059 = vadd.f32 0.0, %v1058
        %v1060 = vpop.f32.mrf.mxu0
        %v1061 = vadd.f32 0.0, %v1060
        %v1062 = vpop.f32.mrf.mxu0
        %v1063 = vadd.f32 0.0, %v1062
        %v1064 = vpop.f32.mrf.mxu0
        %v1065 = vadd.f32 0.0, %v1064
        %1066 = vmatprep.mubr.bf16.mxu0 0
        %1067 = vmatmul.mubr.bf16.gmra.mxu0 %v249
        %v1068 = vpop.f32.mrf.mxu0
        %v1069 = vadd.f32 0.0, %v1068
        %v1070 = vpop.f32.mrf.mxu0
        %v1071 = vadd.f32 0.0, %v1070
        %v1072 = vpop.f32.mrf.mxu0
        %v1073 = vadd.f32 0.0, %v1072
        %v1074 = vpop.f32.mrf.mxu0
        %v1075 = vadd.f32 0.0, %v1074
        %1076 = vmatprep.mubr.bf16.mxu0 0
        %1077 = vmatmul.mubr.bf16.gmra.mxu0 %v250
        %v1078 = vpop.f32.mrf.mxu0
        %v1079 = vadd.f32 0.0, %v1078
        %v1080 = vpop.f32.mrf.mxu0
        %v1081 = vadd.f32 0.0, %v1080
        %v1082 = vpop.f32.mrf.mxu0
        %v1083 = vadd.f32 0.0, %v1082
        %v1084 = vpop.f32.mrf.mxu0
        %v1085 = vadd.f32 0.0, %v1084
        %1086 = vdwg.mxu0
        %1087 = vmatprep.subr.bf16.mxu0 %v705
        %1088 = vmatpush1.bf16.msra.mxu0 %v704
        %1089 = vmatprep.subr.bf16.mxu0 %v694
        %1090 = vmatpush1.bf16.msra.mxu0 %v693
        %1091 = vmatprep.subr.bf16.mxu0 %v683
        %1092 = vmatpush1.bf16.msra.mxu0 %v682
        %1093 = vmatprep.subr.bf16.mxu0 %v672
        %1094 = vmatpush1.bf16.msra.mxu0 %v671
        %1095 = vmatprep.subr.bf16.mxu0 %v661
        %1096 = vmatpush1.bf16.msra.mxu0 %v660
        %1097 = vmatprep.subr.bf16.mxu0 %v650
        %1098 = vmatpush1.bf16.msra.mxu0 %v649
        %1099 = vmatprep.subr.bf16.mxu0 %v639
        %1100 = vmatpush1.bf16.msra.mxu0 %v638
        %1101 = vmatprep.subr.bf16.mxu0 %v628
        %1102 = vmatpush1.bf16.msra.mxu0 %v627
        %1103 = vmatprep.subr.bf16.mxu0 0
        %1104 = vmatpush2.bf16.msra.mxu0 0
        %1105 = vmatprep.subr.bf16.mxu0 0
        %1106 = vmatpush2.bf16.msra.mxu0 0
        %1107 = vmatprep.subr.bf16.mxu0 0
        %1108 = vmatpush2.bf16.msra.mxu0 0
        %1109 = vmatprep.subr.bf16.mxu0 0
        %1110 = vmatpush2.bf16.msra.mxu0 0
        %1111 = vmatprep.subr.bf16.mxu0 0
        %1112 = vmatpush2.bf16.msra.mxu0 0
        %1113 = vmatprep.subr.bf16.mxu0 0
        %1114 = vmatpush2.bf16.msra.mxu0 0
        %1115 = vmatprep.subr.bf16.mxu0 0
        %1116 = vmatpush2.bf16.msra.mxu0 0
        %1117 = vmatprep.subr.bf16.mxu0 0
        %1118 = vmatpush2.bf16.msra.mxu0 0
        %1119 = vmatprep.mubr.bf16.mxu0 0
        %1120 = vmatmul.mubr.bf16.gmra.mxu0 %v247
        %v1121 = vpop.f32.mrf.mxu0
        %v1122 = vadd.f32 0.0, %v1121
        %v1123 = vpop.f32.mrf.mxu0
        %v1124 = vadd.f32 0.0, %v1123
        %v1125 = vpop.f32.mrf.mxu0
        %v1126 = vadd.f32 0.0, %v1125
        %v1127 = vpop.f32.mrf.mxu0
        %v1128 = vadd.f32 0.0, %v1127
        %1129 = vmatprep.mubr.bf16.mxu0 0
        %1130 = vmatmul.mubr.bf16.gmra.mxu0 %v248
        %v1131 = vpop.f32.mrf.mxu0
        %v1132 = vadd.f32 0.0, %v1131
        %v1133 = vpop.f32.mrf.mxu0
        %v1134 = vadd.f32 0.0, %v1133
        %v1135 = vpop.f32.mrf.mxu0
        %v1136 = vadd.f32 0.0, %v1135
        %v1137 = vpop.f32.mrf.mxu0
        %v1138 = vadd.f32 0.0, %v1137
        %1139 = vmatprep.mubr.bf16.mxu0 0
        %1140 = vmatmul.mubr.bf16.gmra.mxu0 %v249
        %v1141 = vpop.f32.mrf.mxu0
        %v1142 = vadd.f32 0.0, %v1141
        %v1143 = vpop.f32.mrf.mxu0
        %v1144 = vadd.f32 0.0, %v1143
        %v1145 = vpop.f32.mrf.mxu0
        %v1146 = vadd.f32 0.0, %v1145
        %v1147 = vpop.f32.mrf.mxu0
        %v1148 = vadd.f32 0.0, %v1147
        %1149 = vmatprep.mubr.bf16.mxu0 0
        %1150 = vmatmul.mubr.bf16.gmra.mxu0 %v250
        %v1151 = vpop.f32.mrf.mxu0
        %v1152 = vadd.f32 0.0, %v1151
        %v1153 = vpop.f32.mrf.mxu0
        %v1154 = vadd.f32 0.0, %v1153
        %v1155 = vpop.f32.mrf.mxu0
        %v1156 = vadd.f32 0.0, %v1155
        %v1157 = vpop.f32.mrf.mxu0
        %v1158 = vadd.f32 0.0, %v1157
        %1159 = vdwg.mxu0
        %1160 = vmatprep.subr.bf16.mxu0 0
        %1161 = vmatpush1.bf16.msra.mxu0 %v706
        %1162 = vmatprep.subr.bf16.mxu0 0
        %1163 = vmatpush1.bf16.msra.mxu0 %v695
        %1164 = vmatprep.subr.bf16.mxu0 0
        %1165 = vmatpush1.bf16.msra.mxu0 %v684
        %1166 = vmatprep.subr.bf16.mxu0 0
        %1167 = vmatpush1.bf16.msra.mxu0 %v673
        %1168 = vmatprep.subr.bf16.mxu0 0
        %1169 = vmatpush1.bf16.msra.mxu0 %v662
        %1170 = vmatprep.subr.bf16.mxu0 0
        %1171 = vmatpush1.bf16.msra.mxu0 %v651
        %1172 = vmatprep.subr.bf16.mxu0 0
        %1173 = vmatpush1.bf16.msra.mxu0 %v640
        %1174 = vmatprep.subr.bf16.mxu0 0
        %1175 = vmatpush1.bf16.msra.mxu0 %v629
        %1176 = vmatprep.subr.bf16.mxu0 0
        %1177 = vmatpush2.bf16.msra.mxu0 0
        %1178 = vmatprep.subr.bf16.mxu0 0
        %1179 = vmatpush2.bf16.msra.mxu0 0
        %1180 = vmatprep.subr.bf16.mxu0 0
        %1181 = vmatpush2.bf16.msra.mxu0 0
        %1182 = vmatprep.subr.bf16.mxu0 0
        %1183 = vmatpush2.bf16.msra.mxu0 0
        %1184 = vmatprep.subr.bf16.mxu0 0
        %1185 = vmatpush2.bf16.msra.mxu0 0
        %1186 = vmatprep.subr.bf16.mxu0 0
        %1187 = vmatpush2.bf16.msra.mxu0 0
        %1188 = vmatprep.subr.bf16.mxu0 0
        %1189 = vmatpush2.bf16.msra.mxu0 0
        %1190 = vmatprep.subr.bf16.mxu0 0
        %1191 = vmatpush2.bf16.msra.mxu0 0
        %1192 = vmatprep.mubr.bf16.mxu0 0
        %1193 = vmatmul.mubr.bf16.gmra.mxu0 %v247
        %v1194 = vpop.f32.mrf.mxu0
        %v1195 = vadd.f32 0.0, %v1194
        %v1196 = vpop.f32.mrf.mxu0
        %v1197 = vpop.f32.mrf.mxu0
        %v1198 = vadd.f32 0.0, %v1197
        %v1199 = vpop.f32.mrf.mxu0
        %1200 = vmatprep.mubr.bf16.mxu0 0
        %1201 = vmatmul.mubr.bf16.gmra.mxu0 %v248
        %v1202 = vpop.f32.mrf.mxu0
        %v1203 = vadd.f32 0.0, %v1202
        %v1204 = vpop.f32.mrf.mxu0
        %v1205 = vpop.f32.mrf.mxu0
        %v1206 = vadd.f32 0.0, %v1205
        %v1207 = vpop.f32.mrf.mxu0
        %1208 = vmatprep.mubr.bf16.mxu0 0
        %1209 = vmatmul.mubr.bf16.gmra.mxu0 %v249
        %v1210 = vpop.f32.mrf.mxu0
        %v1211 = vadd.f32 0.0, %v1210
        %v1212 = vpop.f32.mrf.mxu0
        %v1213 = vpop.f32.mrf.mxu0
        %v1214 = vadd.f32 0.0, %v1213
        %v1215 = vpop.f32.mrf.mxu0
        %1216 = vmatprep.mubr.bf16.mxu0 0
        %1217 = vmatmul.mubr.bf16.gmra.mxu0 %v250
        %v1218 = vpop.f32.mrf.mxu0
        %v1219 = vadd.f32 0.0, %v1218
        %v1220 = vpop.f32.mrf.mxu0
        %v1221 = vpop.f32.mrf.mxu0
        %v1222 = vadd.f32 0.0, %v1221
        %v1223 = vpop.f32.mrf.mxu0
        %1224 = vdwg.mxu0
        %1225 = vst [vmem:[#allocation2] sm:$0xff] %v830
        %1226 = vst [vmem:[#allocation2 + $0x8] sm:$0xff] %v832
        %1227 = vst [vmem:[#allocation2 + $0x10] sm:$0xff] %v903
        %1228 = vst [vmem:[#allocation2 + $0x18] sm:$0xff] %v905
        %1229 = vst [vmem:[#allocation2 + $0x20] sm:$0xff] %v976
        %1230 = vst [vmem:[#allocation2 + $0x28] sm:$0xff] %v978
        %1231 = vst [vmem:[#allocation2 + $0x30] sm:$0xff] %v1049
        %1232 = vst [vmem:[#allocation2 + $0x38] sm:$0xff] %v1051
        %1233 = vst [vmem:[#allocation2 + $0x40] sm:$0xff] %v1122
        %1234 = vst [vmem:[#allocation2 + $0x48] sm:$0xff] %v1124
        %1235 = vst [vmem:[#allocation2 + $0x50] sm:$0xff] %v1195
        %1236 = vst [vmem:[#allocation2 + $0x58] sm:$0xff] %v834
        %1237 = vst [vmem:[#allocation2 + $0x60] sm:$0xff] %v836
        %1238 = vst [vmem:[#allocation2 + $0x68] sm:$0xff] %v907
        %1239 = vst [vmem:[#allocation2 + $0x70] sm:$0xff] %v909
        %1240 = vst [vmem:[#allocation2 + $0x78] sm:$0xff] %v980
        %1241 = vst [vmem:[#allocation2 + $0x80] sm:$0xff] %v982
        %1242 = vst [vmem:[#allocation2 + $0x88] sm:$0xff] %v1053
        %1243 = vst [vmem:[#allocation2 + $0x90] sm:$0xff] %v1055
        %1244 = vst [vmem:[#allocation2 + $0x98] sm:$0xff] %v1126
        %1245 = vst [vmem:[#allocation2 + $0xa0] sm:$0xff] %v1128
        %1246 = vst [vmem:[#allocation2 + $0xa8] sm:$0xff] %v1198
        %1247 = vst [vmem:[#allocation2 + $0xb0] sm:$0xff] %v840
        %1248 = vst [vmem:[#allocation2 + $0xb8] sm:$0xff] %v842
        %1249 = vst [vmem:[#allocation2 + $0xc0] sm:$0xff] %v913
        %1250 = vst [vmem:[#allocation2 + $0xc8] sm:$0xff] %v915
        %1251 = vst [vmem:[#allocation2 + $0xd0] sm:$0xff] %v986
        %1252 = vst [vmem:[#allocation2 + $0xd8] sm:$0xff] %v988
        %1253 = vst [vmem:[#allocation2 + $0xe0] sm:$0xff] %v1059
        %1254 = vst [vmem:[#allocation2 + $0xe8] sm:$0xff] %v1061
        %1255 = vst [vmem:[#allocation2 + $0xf0] sm:$0xff] %v1132
        %1256 = vst [vmem:[#allocation2 + $0xf8] sm:$0xff] %v1134
        %1257 = vst [vmem:[#allocation2 + $0x100] sm:$0xff] %v1203
        %1258 = vst [vmem:[#allocation2 + $0x108] sm:$0xff] %v844
        %1259 = vst [vmem:[#allocation2 + $0x110] sm:$0xff] %v846
        %1260 = vst [vmem:[#allocation2 + $0x118] sm:$0xff] %v917
        %1261 = vst [vmem:[#allocation2 + $0x120] sm:$0xff] %v919
        %1262 = vst [vmem:[#allocation2 + $0x128] sm:$0xff] %v990
        %1263 = vst [vmem:[#allocation2 + $0x130] sm:$0xff] %v992
        %1264 = vst [vmem:[#allocation2 + $0x138] sm:$0xff] %v1063
        %1265 = vst [vmem:[#allocation2 + $0x140] sm:$0xff] %v1065
        %1266 = vst [vmem:[#allocation2 + $0x148] sm:$0xff] %v1136
        %1267 = vst [vmem:[#allocation2 + $0x150] sm:$0xff] %v1138
        %1268 = vst [vmem:[#allocation2 + $0x158] sm:$0xff] %v1206
        %1269 = vst [vmem:[#allocation2 + $0x160] sm:$0xff] %v850
        %1270 = vst [vmem:[#allocation2 + $0x168] sm:$0xff] %v852
        %1271 = vst [vmem:[#allocation2 + $0x170] sm:$0xff] %v923
        %1272 = vst [vmem:[#allocation2 + $0x178] sm:$0xff] %v925
        %1273 = vst [vmem:[#allocation2 + $0x180] sm:$0xff] %v996
        %1274 = vst [vmem:[#allocation2 + $0x188] sm:$0xff] %v998
        %1275 = vst [vmem:[#allocation2 + $0x190] sm:$0xff] %v1069
        %1276 = vst [vmem:[#allocation2 + $0x198] sm:$0xff] %v1071
        %1277 = vst [vmem:[#allocation2 + $0x1a0] sm:$0xff] %v1142
        %1278 = vst [vmem:[#allocation2 + $0x1a8] sm:$0xff] %v1144
        %1279 = vst [vmem:[#allocation2 + $0x1b0] sm:$0xff] %v1211
        %1280 = vst [vmem:[#allocation2 + $0x1b8] sm:$0xff] %v854
        %1281 = vst [vmem:[#allocation2 + $0x1c0] sm:$0xff] %v856
        %1282 = vst [vmem:[#allocation2 + $0x1c8] sm:$0xff] %v927
        %1283 = vst [vmem:[#allocation2 + $0x1d0] sm:$0xff] %v929
        %1284 = vst [vmem:[#allocation2 + $0x1d8] sm:$0xff] %v1000
        %1285 = vst [vmem:[#allocation2 + $0x1e0] sm:$0xff] %v1002
        %1286 = vst [vmem:[#allocation2 + $0x1e8] sm:$0xff] %v1073
        %1287 = vst [vmem:[#allocation2 + $0x1f0] sm:$0xff] %v1075
        %1288 = vst [vmem:[#allocation2 + $0x1f8] sm:$0xff] %v1146
        %1289 = vst [vmem:[#allocation2 + $0x200] sm:$0xff] %v1148
        %1290 = vst [vmem:[#allocation2 + $0x208] sm:$0xff] %v1214
        %1291 = vst [vmem:[#allocation2 + $0x210] sm:$0xff] %v860
        %1292 = vst [vmem:[#allocation2 + $0x218] sm:$0xff] %v862
        %1293 = vst [vmem:[#allocation2 + $0x220] sm:$0xff] %v933
        %1294 = vst [vmem:[#allocation2 + $0x228] sm:$0xff] %v935
        %1295 = vst [vmem:[#allocation2 + $0x230] sm:$0xff] %v1006
        %1296 = vst [vmem:[#allocation2 + $0x238] sm:$0xff] %v1008
        %1297 = vst [vmem:[#allocation2 + $0x240] sm:$0xff] %v1079
        %1298 = vst [vmem:[#allocation2 + $0x248] sm:$0xff] %v1081
        %1299 = vst [vmem:[#allocation2 + $0x250] sm:$0xff] %v1152
        %1300 = vst [vmem:[#allocation2 + $0x258] sm:$0xff] %v1154
        %1301 = vst [vmem:[#allocation2 + $0x260] sm:$0xff] %v1219
        %1302 = vst [vmem:[#allocation2 + $0x268] sm:$0xff] %v864
        %1303 = vst [vmem:[#allocation2 + $0x270] sm:$0xff] %v866
        %1304 = vst [vmem:[#allocation2 + $0x278] sm:$0xff] %v937
        %1305 = vst [vmem:[#allocation2 + $0x280] sm:$0xff] %v939
        %1306 = vst [vmem:[#allocation2 + $0x288] sm:$0xff] %v1010
        %1307 = vst [vmem:[#allocation2 + $0x290] sm:$0xff] %v1012
        %1308 = vst [vmem:[#allocation2 + $0x298] sm:$0xff] %v1083
        %1309 = vst [vmem:[#allocation2 + $0x2a0] sm:$0xff] %v1085
        %1310 = vst [vmem:[#allocation2 + $0x2a8] sm:$0xff] %v1156
        %1311 = vst [vmem:[#allocation2 + $0x2b0] sm:$0xff] %v1158
        %1312 = vst [vmem:[#allocation2 + $0x2b8] sm:$0xff] %v1222
        %v1313 = vld [vmem:[%s213] sm:$0xf]
        %1314 = vmatprep.subr.bf16.mxu0 0
        %1315 = vmatpush1.bf16.xpose.msra.mxu0 0
        %1316 = vmatprep.subr.bf16.mxu0 0
        %1317 = vmatpush1.bf16.xpose.msra.mxu0 0
        %1318 = vmatprep.subr.bf16.mxu0 0
        %1319 = vmatpush1.bf16.xpose.msra.mxu0 0
        %1320 = vmatprep.subr.bf16.mxu0 0
        %1321 = vmatpush1.bf16.xpose.msra.mxu0 0
        %1322 = vmatprep.subr.bf16.mxu0 0
        %1323 = vmatpush1.bf16.xpose.msra.mxu0 %v250
        %1324 = vmatprep.subr.bf16.mxu0 0
        %1325 = vmatpush1.bf16.xpose.msra.mxu0 %v249
        %1326 = vmatprep.subr.bf16.mxu0 0
        %1327 = vmatpush1.bf16.xpose.msra.mxu0 %v248
        %1328 = vmatprep.subr.bf16.mxu0 0
        %1329 = vmatpush1.bf16.xpose.msra.mxu0 %v247
        %1330 = vmatprep.subr.bf16.mxu0 0
        %1331 = vmatpush2.bf16.xpose.msra.mxu0 0
        %1332 = vmatprep.subr.bf16.mxu0 0
        %1333 = vmatpush2.bf16.xpose.msra.mxu0 0
        %1334 = vmatprep.subr.bf16.mxu0 0
        %1335 = vmatpush2.bf16.xpose.msra.mxu0 0
        %1336 = vmatprep.subr.bf16.mxu0 0
        %1337 = vmatpush2.bf16.xpose.msra.mxu0 0
        %1338 = vmatprep.subr.bf16.mxu0 0
        %1339 = vmatpush2.bf16.xpose.msra.mxu0 0
        %1340 = vmatprep.subr.bf16.mxu0 0
        %1341 = vmatpush2.bf16.xpose.msra.mxu0 0
        %1342 = vmatprep.subr.bf16.mxu0 0
        %1343 = vmatpush2.bf16.xpose.msra.mxu0 0
        %1344 = vmatprep.subr.bf16.mxu0 0
        %1345 = vmatpush2.bf16.xpose.msra.mxu0 0
        %1346 = vmatprep.mubr.bf16.mxu0 0
        %1347 = vmatmul.mubr.bf16.gmra.mxu0 %v1313
        %v1348 = vpop.f32.mrf.mxu0
        %v1349 = vadd.f32 0.0, %v1348
        %v1350 = vpop.f32.mrf.mxu0
        %v1351 = vpop.f32.mrf.mxu0
        %v1352 = vpop.f32.mrf.mxu0
        %1353 = vdwg.mxu0
        %v1354 = vld [vmem:[#allocation2 + $0x50] sm:$0xff]
        %v1355 = vld [vmem:[#allocation2 + $0xa8] sm:$0xff]
        %v1356 = vld [vmem:[#allocation2 + $0x100] sm:$0xff]
        %v1357 = vld [vmem:[#allocation2 + $0x158] sm:$0xff]
        %v1358 = vld [vmem:[#allocation2 + $0x1b0] sm:$0xff]
        %v1359 = vld [vmem:[#allocation2 + $0x208] sm:$0xff]
        %v1360 = vld [vmem:[#allocation2 + $0x260] sm:$0xff]
        %v1361 = vld [vmem:[#allocation2 + $0x2b8] sm:$0xff]
        %v1362 = vld [vmem:[%s217] sm:$0x1f]
        %p1363 = scmp.ne.s32.totalorder %s16, 2
        %s1364 = scalar_select %p1363, 0.0, -inf
        %v1365 = vld [vmem:[#allocation2] sm:$0xff]
        %v1366 = vld [vmem:[#allocation2 + $0x58] sm:$0xff]
        %v1367 = vld [vmem:[#allocation2 + $0xb0] sm:$0xff]
        %v1368 = vld [vmem:[#allocation2 + $0x108] sm:$0xff]
        %v1369 = vld [vmem:[#allocation2 + $0x160] sm:$0xff]
        %v1370 = vld [vmem:[#allocation2 + $0x1b8] sm:$0xff]
        %v1371 = vld [vmem:[#allocation2 + $0x210] sm:$0xff]
        %v1372 = vld [vmem:[#allocation2 + $0x268] sm:$0xff]
        %v1373 = vld [vmem:[#allocation2 + $0x28] sm:$0xff]
        %v1374 = vld [vmem:[#allocation2 + $0x80] sm:$0xff]
        %v1375 = vld [vmem:[#allocation2 + $0xd8] sm:$0xff]
        %v1376 = vld [vmem:[#allocation2 + $0x130] sm:$0xff]
        %v1377 = vld [vmem:[#allocation2 + $0x188] sm:$0xff]
        %v1378 = vld [vmem:[#allocation2 + $0x1e0] sm:$0xff]
        %v1379 = vld [vmem:[#allocation2 + $0x238] sm:$0xff]
        %v1380 = vld [vmem:[#allocation2 + $0x290] sm:$0xff]
        %v1381 = vlaneseq
        %v1382 = vshrl.u32 %v1381, 7
        %v1383 = vsub.s32 0, %v1382
        %v1384 = vrot.slane %v1349, %v1383
        %1386 = vset.pattern.permute.xlu0 0
        %1387 = vperm.xlu0 %1386, %v1354
        %v1388 = vpop.permute.xlu0 %1387
        %1391 = vset.pattern.permute.xlu0 0
        %1392 = vperm.xlu0 %1391, %v1355
        %v1393 = vpop.permute.xlu0 %1392
        %1396 = vset.pattern.permute.xlu0 0
        %1397 = vperm.xlu0 %1396, %v1356
        %v1398 = vpop.permute.xlu0 %1397
        %1401 = vset.pattern.permute.xlu0 0
        %1402 = vperm.xlu0 %1401, %v1357
        %v1403 = vpop.permute.xlu0 %1402
        %1406 = vset.pattern.permute.xlu0 0
        %1407 = vperm.xlu0 %1406, %v1358
        %v1408 = vpop.permute.xlu0 %1407
        %1411 = vset.pattern.permute.xlu0 0
        %1412 = vperm.xlu0 %1411, %v1359
        %v1413 = vpop.permute.xlu0 %1412
        %1416 = vset.pattern.permute.xlu0 0
        %1417 = vperm.xlu0 %1416, %v1360
        %v1418 = vpop.permute.xlu0 %1417
        %1421 = vset.pattern.permute.xlu0 0
        %1422 = vperm.xlu0 %1421, %v1361
        %v1423 = vpop.permute.xlu0 %1422
        %v1425 = vadd.f32 %v1384, %v1388
        %v1426 = vadd.f32 %v1384, %v1393
        %v1427 = vadd.f32 %v1384, %v1398
        %v1428 = vadd.f32 %v1384, %v1403
        %v1429 = vadd.f32 %v1384, %v1408
        %v1430 = vadd.f32 %v1384, %v1413
        %v1431 = vadd.f32 %v1384, %v1418
        %v1432 = vadd.f32 %v1384, %v1423
        %vm1433 = vcmp.gt.f32.partialorder %v1425, 0.0
        %vm1434 = vcmp.gt.f32.partialorder %v1426, 0.0
        %vm1435 = vcmp.gt.f32.partialorder %v1427, 0.0
        %vm1436 = vcmp.gt.f32.partialorder %v1428, 0.0
        %vm1437 = vcmp.gt.f32.partialorder %v1429, 0.0
        %vm1438 = vcmp.gt.f32.partialorder %v1430, 0.0
        %vm1439 = vcmp.gt.f32.partialorder %v1431, 0.0
        %vm1440 = vcmp.gt.f32.partialorder %v1432, 0.0
        %v1441 = vmul.f32 %v1425, 0.2
        %v1442 = vmul.f32 %v1426, 0.2
        %v1443 = vmul.f32 %v1427, 0.2
        %v1444 = vmul.f32 %v1428, 0.2
        %v1445 = vmul.f32 %v1429, 0.2
        %v1446 = vmul.f32 %v1430, 0.2
        %v1447 = vmul.f32 %v1431, 0.2
        %v1448 = vmul.f32 %v1432, 0.2
        %v1449 = vsel %vm1433, %v1425, %v1441
        %v1450 = vsel %vm1434, %v1426, %v1442
        %v1451 = vsel %vm1435, %v1427, %v1443
        %v1452 = vsel %vm1436, %v1428, %v1444
        %v1453 = vsel %vm1437, %v1429, %v1445
        %v1454 = vsel %vm1438, %v1430, %v1446
        %v1455 = vsel %vm1439, %v1431, %v1447
        %v1456 = vsel %vm1440, %v1432, %v1448
        %vm1457 = vcmask 523264
        %v1458 = vsel %vm1457, %v1449, -inf
        %1459 = vmax.xlane.f32.xlu0 %v1458
        %v1460 = vpop.xlane.xlu0 %1459
        %v1461 = vsel %vm1457, %v1450, -inf
        %1462 = vmax.xlane.f32.xlu0 %v1461
        %v1463 = vpop.xlane.xlu0 %1462
        %v1464 = vsel %vm1457, %v1451, -inf
        %1465 = vmax.xlane.f32.xlu0 %v1464
        %v1466 = vpop.xlane.xlu0 %1465
        %v1467 = vsel %vm1457, %v1452, -inf
        %1468 = vmax.xlane.f32.xlu0 %v1467
        %v1469 = vpop.xlane.xlu0 %1468
        %v1470 = vsel %vm1457, %v1453, -inf
        %1471 = vmax.xlane.f32.xlu0 %v1470
        %v1472 = vpop.xlane.xlu0 %1471
        %v1473 = vsel %vm1457, %v1454, -inf
        %1474 = vmax.xlane.f32.xlu0 %v1473
        %v1475 = vpop.xlane.xlu0 %1474
        %v1476 = vsel %vm1457, %v1455, -inf
        %1477 = vmax.xlane.f32.xlu0 %v1476
        %v1478 = vpop.xlane.xlu0 %1477
        %v1479 = vsel %vm1457, %v1456, -inf
        %1480 = vmax.xlane.f32.xlu0 %v1479
        %v1481 = vpop.xlane.xlu0 %1480
        %v1482 = vsub.f32 %v1449, %v1460
        %v1483 = vsub.f32 %v1450, %v1463
        %v1484 = vsub.f32 %v1451, %v1466
        %v1485 = vsub.f32 %v1452, %v1469
        %v1486 = vsub.f32 %v1453, %v1472
        %v1487 = vsub.f32 %v1454, %v1475
        %v1488 = vsub.f32 %v1455, %v1478
        %v1489 = vsub.f32 %v1456, %v1481
        %v1490 = vmul.f32 %v1482, 1.442695
        %v1491 = vpow.pop %v1490
        %v1492 = vmul.f32 %v1483, 1.442695
        %v1493 = vpow.pop %v1492
        %v1494 = vmul.f32 %v1484, 1.442695
        %v1495 = vpow.pop %v1494
        %v1496 = vmul.f32 %v1485, 1.442695
        %v1497 = vpow.pop %v1496
        %v1498 = vmul.f32 %v1486, 1.442695
        %v1499 = vpow.pop %v1498
        %v1500 = vmul.f32 %v1487, 1.442695
        %v1501 = vpow.pop %v1500
        %v1502 = vmul.f32 %v1488, 1.442695
        %v1503 = vpow.pop %v1502
        %v1504 = vmul.f32 %v1489, 1.442695
        %v1505 = vpow.pop %v1504
        %v1506 = vsel %vm1457, %v1491, 0.0
        %1507 = vadd.xlane.f32.xlu0 %v1506
        %v1508 = vpop.xlane.xlu0 %1507
        %v1509 = vsel %vm1457, %v1493, 0.0
        %1510 = vadd.xlane.f32.xlu0 %v1509
        %v1511 = vpop.xlane.xlu0 %1510
        %v1512 = vsel %vm1457, %v1495, 0.0
        %1513 = vadd.xlane.f32.xlu0 %v1512
        %v1514 = vpop.xlane.xlu0 %1513
        %v1515 = vsel %vm1457, %v1497, 0.0
        %1516 = vadd.xlane.f32.xlu0 %v1515
        %v1517 = vpop.xlane.xlu0 %1516
        %v1518 = vsel %vm1457, %v1499, 0.0
        %1519 = vadd.xlane.f32.xlu0 %v1518
        %v1520 = vpop.xlane.xlu0 %1519
        %v1521 = vsel %vm1457, %v1501, 0.0
        %1522 = vadd.xlane.f32.xlu0 %v1521
        %v1523 = vpop.xlane.xlu0 %1522
        %v1524 = vsel %vm1457, %v1503, 0.0
        %1525 = vadd.xlane.f32.xlu0 %v1524
        %v1526 = vpop.xlane.xlu0 %1525
        %v1527 = vsel %vm1457, %v1505, 0.0
        %1528 = vadd.xlane.f32.xlu0 %v1527
        %v1529 = vpop.xlane.xlu0 %1528
        %v1530 = vrcp.pop %v1508
        %v1531 = vrcp.pop %v1511
        %v1532 = vrcp.pop %v1514
        %v1533 = vrcp.pop %v1517
        %v1534 = vrcp.pop %v1520
        %v1535 = vrcp.pop %v1523
        %v1536 = vrcp.pop %v1526
        %v1537 = vrcp.pop %v1529
        %v1538 = vmul.f32 %v1491, %v1530
        %v1539 = vmul.f32 %v1493, %v1531
        %v1540 = vmul.f32 %v1495, %v1532
        %v1541 = vmul.f32 %v1497, %v1533
        %v1542 = vmul.f32 %v1499, %v1534
        %v1543 = vmul.f32 %v1501, %v1535
        %v1544 = vmul.f32 %v1503, %v1536
        %v1545 = vmul.f32 %v1505, %v1537
        %v1546 = vpack.c.bf16 %v1539, %v1538
        %v1547 = vpack.c.bf16 %v1541, %v1540
        %v1548 = vpack.c.bf16 %v1543, %v1542
        %v1549 = vpack.c.bf16 %v1545, %v1544
        %v1550 = vpack.c.bf16 %v1366, %v1365
        %v1551 = vpack.c.bf16 %v1368, %v1367
        %v1552 = vpack.c.bf16 %v1370, %v1369
        %v1553 = vpack.c.bf16 %v1372, %v1371
        %v1555 = vsel %vm1457, %v1546, 0
        %v1558 = vsel %vm1457, %v1547, 0
        %v1561 = vsel %vm1457, %v1548, 0
        %v1564 = vsel %vm1457, %v1549, 0
        %1566 = vmatprep.subr.bf16.mxu0 0
        %1567 = vmatpush1.bf16.msra.mxu0 0
        %1568 = vmatprep.subr.bf16.mxu0 0
        %1569 = vmatpush1.bf16.msra.mxu0 0
        %1570 = vmatprep.subr.bf16.mxu0 0
        %1571 = vmatpush1.bf16.msra.mxu0 0
        %1572 = vmatprep.subr.bf16.mxu0 0
        %1573 = vmatpush1.bf16.msra.mxu0 0
        %1574 = vmatprep.subr.bf16.mxu0 0
        %1575 = vmatpush1.bf16.msra.mxu0 %v1553
        %1576 = vmatprep.subr.bf16.mxu0 0
        %1577 = vmatpush1.bf16.msra.mxu0 %v1552
        %1578 = vmatprep.subr.bf16.mxu0 0
        %1579 = vmatpush1.bf16.msra.mxu0 %v1551
        %1580 = vmatprep.subr.bf16.mxu0 0
        %1581 = vmatpush1.bf16.msra.mxu0 %v1550
        %1582 = vmatprep.subr.bf16.mxu0 0
        %1583 = vmatpush2.bf16.msra.mxu0 0
        %1584 = vmatprep.subr.bf16.mxu0 0
        %1585 = vmatpush2.bf16.msra.mxu0 0
        %1586 = vmatprep.subr.bf16.mxu0 0
        %1587 = vmatpush2.bf16.msra.mxu0 0
        %1588 = vmatprep.subr.bf16.mxu0 0
        %1589 = vmatpush2.bf16.msra.mxu0 0
        %1590 = vmatprep.subr.bf16.mxu0 0
        %1591 = vmatpush2.bf16.msra.mxu0 0
        %1592 = vmatprep.subr.bf16.mxu0 0
        %1593 = vmatpush2.bf16.msra.mxu0 0
        %1594 = vmatprep.subr.bf16.mxu0 0
        %1595 = vmatpush2.bf16.msra.mxu0 0
        %1596 = vmatprep.subr.bf16.mxu0 0
        %1597 = vmatpush2.bf16.msra.mxu0 0
        %1598 = vmatprep.mubr.bf16.mxu0 0
        %1599 = vmatmul.mubr.bf16.gmra.mxu0 %v1555
        %v1600 = vpop.f32.mrf.mxu0
        %v1601 = vadd.f32 %v1373, %v1600
        %v1602 = vpop.f32.mrf.mxu0
        %v1603 = vpop.f32.mrf.mxu0
        %v1604 = vadd.f32 %v1374, %v1603
        %v1605 = vpop.f32.mrf.mxu0
        %1606 = vmatprep.mubr.bf16.mxu0 0
        %1607 = vmatmul.mubr.bf16.gmra.mxu0 %v1558
        %v1608 = vpop.f32.mrf.mxu0
        %v1609 = vadd.f32 %v1375, %v1608
        %v1610 = vpop.f32.mrf.mxu0
        %v1611 = vpop.f32.mrf.mxu0
        %v1612 = vadd.f32 %v1376, %v1611
        %v1613 = vpop.f32.mrf.mxu0
        %1614 = vmatprep.mubr.bf16.mxu0 0
        %1615 = vmatmul.mubr.bf16.gmra.mxu0 %v1561
        %v1616 = vpop.f32.mrf.mxu0
        %v1617 = vadd.f32 %v1377, %v1616
        %v1618 = vpop.f32.mrf.mxu0
        %v1619 = vpop.f32.mrf.mxu0
        %v1620 = vadd.f32 %v1378, %v1619
        %v1621 = vpop.f32.mrf.mxu0
        %1622 = vmatprep.mubr.bf16.mxu0 0
        %1623 = vmatmul.mubr.bf16.gmra.mxu0 %v1564
        %v1624 = vpop.f32.mrf.mxu0
        %v1625 = vadd.f32 %v1379, %v1624
        %v1626 = vpop.f32.mrf.mxu0
        %v1627 = vpop.f32.mrf.mxu0
        %v1628 = vadd.f32 %v1380, %v1627
        %v1629 = vpop.f32.mrf.mxu0
        %1630 = vdwg.mxu0
        %v1631 = vlaneseq
        %v1632 = vshrl.u32 %v1631, 7
        %v1633 = vsub.s32 0, %v1632
        %v1634 = vrot.slane %v1362, %v1633
        %v1635 = vadd.f32 %v1601, %v1634
        %v1636 = vadd.f32 %v1604, %v1634
        %v1637 = vadd.f32 %v1609, %v1634
        %v1638 = vadd.f32 %v1612, %v1634
        %v1639 = vadd.f32 %v1617, %v1634
        %v1640 = vadd.f32 %v1620, %v1634
        %v1641 = vadd.f32 %v1625, %v1634
        %v1642 = vadd.f32 %v1628, %v1634
        %v1643 = vstv %s1364
        %v1644 = vmax.f32 %v1635, %v1643
        %v1645 = vmax.f32 %v1636, %v1643
        %v1646 = vmax.f32 %v1637, %v1643
        %v1647 = vmax.f32 %v1638, %v1643
        %v1648 = vmax.f32 %v1639, %v1643
        %v1649 = vmax.f32 %v1640, %v1643
        %v1650 = vmax.f32 %v1641, %v1643
        %v1651 = vmax.f32 %v1642, %v1643
        %v1652 = vadd.f32 %v1644, 0.0
        %v1653 = vadd.f32 %v1645, 0.0
        %v1654 = vadd.f32 %v1646, 0.0
        %v1655 = vadd.f32 %v1647, 0.0
        %v1656 = vadd.f32 %v1648, 0.0
        %v1657 = vadd.f32 %v1649, 0.0
        %v1658 = vadd.f32 %v1650, 0.0
        %v1659 = vadd.f32 %v1651, 0.0
        %v1660 = vld [vmem:[#allocation2 + $0x8] sm:$0xff]
        %v1661 = vld [vmem:[#allocation2 + $0x60] sm:$0xff]
        %v1662 = vld [vmem:[#allocation2 + $0xb8] sm:$0xff]
        %v1663 = vld [vmem:[#allocation2 + $0x110] sm:$0xff]
        %v1664 = vld [vmem:[#allocation2 + $0x168] sm:$0xff]
        %v1665 = vld [vmem:[#allocation2 + $0x1c0] sm:$0xff]
        %v1666 = vld [vmem:[#allocation2 + $0x218] sm:$0xff]
        %v1667 = vld [vmem:[#allocation2 + $0x270] sm:$0xff]
        %v1668 = vld [vmem:[#allocation2 + $0x30] sm:$0xff]
        %v1669 = vld [vmem:[#allocation2 + $0x88] sm:$0xff]
        %v1670 = vld [vmem:[#allocation2 + $0xe0] sm:$0xff]
        %v1671 = vld [vmem:[#allocation2 + $0x138] sm:$0xff]
        %v1672 = vld [vmem:[#allocation2 + $0x190] sm:$0xff]
        %v1673 = vld [vmem:[#allocation2 + $0x1e8] sm:$0xff]
        %v1674 = vld [vmem:[#allocation2 + $0x240] sm:$0xff]
        %v1675 = vld [vmem:[#allocation2 + $0x298] sm:$0xff]
        %v1676 = vlaneseq
        %v1677 = vshrl.u32 %v1676, 7
        %v1678 = vsub.s32 1, %v1677
        %v1679 = vrot.slane %v1349, %v1678
        %1680 = vset.pattern.permute.xlu0 1
        %1681 = vperm.xlu0 %1680, %v1354
        %v1682 = vpop.permute.xlu0 %1681
        %1684 = vset.pattern.permute.xlu0 1
        %1685 = vperm.xlu0 %1684, %v1355
        %v1686 = vpop.permute.xlu0 %1685
        %1688 = vset.pattern.permute.xlu0 1
        %1689 = vperm.xlu0 %1688, %v1356
        %v1690 = vpop.permute.xlu0 %1689
        %1692 = vset.pattern.permute.xlu0 1
        %1693 = vperm.xlu0 %1692, %v1357
        %v1694 = vpop.permute.xlu0 %1693
        %1696 = vset.pattern.permute.xlu0 1
        %1697 = vperm.xlu0 %1696, %v1358
        %v1698 = vpop.permute.xlu0 %1697
        %1700 = vset.pattern.permute.xlu0 1
        %1701 = vperm.xlu0 %1700, %v1359
        %v1702 = vpop.permute.xlu0 %1701
        %1704 = vset.pattern.permute.xlu0 1
        %1705 = vperm.xlu0 %1704, %v1360
        %v1706 = vpop.permute.xlu0 %1705
        %1708 = vset.pattern.permute.xlu0 1
        %1709 = vperm.xlu0 %1708, %v1361
        %v1710 = vpop.permute.xlu0 %1709
        %v1712 = vadd.f32 %v1679, %v1682
        %v1713 = vadd.f32 %v1679, %v1686
        %v1714 = vadd.f32 %v1679, %v1690
        %v1715 = vadd.f32 %v1679, %v1694
        %v1716 = vadd.f32 %v1679, %v1698
        %v1717 = vadd.f32 %v1679, %v1702
        %v1718 = vadd.f32 %v1679, %v1706
        %v1719 = vadd.f32 %v1679, %v1710
        %vm1720 = vcmp.gt.f32.partialorder %v1712, 0.0
        %vm1721 = vcmp.gt.f32.partialorder %v1713, 0.0
        %vm1722 = vcmp.gt.f32.partialorder %v1714, 0.0
        %vm1723 = vcmp.gt.f32.partialorder %v1715, 0.0
        %vm1724 = vcmp.gt.f32.partialorder %v1716, 0.0
        %vm1725 = vcmp.gt.f32.partialorder %v1717, 0.0
        %vm1726 = vcmp.gt.f32.partialorder %v1718, 0.0
        %vm1727 = vcmp.gt.f32.partialorder %v1719, 0.0
        %v1728 = vmul.f32 %v1712, 0.2
        %v1729 = vmul.f32 %v1713, 0.2
        %v1730 = vmul.f32 %v1714, 0.2
        %v1731 = vmul.f32 %v1715, 0.2
        %v1732 = vmul.f32 %v1716, 0.2
        %v1733 = vmul.f32 %v1717, 0.2
        %v1734 = vmul.f32 %v1718, 0.2
        %v1735 = vmul.f32 %v1719, 0.2
        %v1736 = vsel %vm1720, %v1712, %v1728
        %v1737 = vsel %vm1721, %v1713, %v1729
        %v1738 = vsel %vm1722, %v1714, %v1730
        %v1739 = vsel %vm1723, %v1715, %v1731
        %v1740 = vsel %vm1724, %v1716, %v1732
        %v1741 = vsel %vm1725, %v1717, %v1733
        %v1742 = vsel %vm1726, %v1718, %v1734
        %v1743 = vsel %vm1727, %v1719, %v1735
        %v1744 = vsel %vm1457, %v1736, -inf
        %1745 = vmax.xlane.f32.xlu0 %v1744
        %v1746 = vpop.xlane.xlu0 %1745
        %v1747 = vsel %vm1457, %v1737, -inf
        %1748 = vmax.xlane.f32.xlu0 %v1747
        %v1749 = vpop.xlane.xlu0 %1748
        %v1750 = vsel %vm1457, %v1738, -inf
        %1751 = vmax.xlane.f32.xlu0 %v1750
        %v1752 = vpop.xlane.xlu0 %1751
        %v1753 = vsel %vm1457, %v1739, -inf
        %1754 = vmax.xlane.f32.xlu0 %v1753
        %v1755 = vpop.xlane.xlu0 %1754
        %v1756 = vsel %vm1457, %v1740, -inf
        %1757 = vmax.xlane.f32.xlu0 %v1756
        %v1758 = vpop.xlane.xlu0 %1757
        %v1759 = vsel %vm1457, %v1741, -inf
        %1760 = vmax.xlane.f32.xlu0 %v1759
        %v1761 = vpop.xlane.xlu0 %1760
        %v1762 = vsel %vm1457, %v1742, -inf
        %1763 = vmax.xlane.f32.xlu0 %v1762
        %v1764 = vpop.xlane.xlu0 %1763
        %v1765 = vsel %vm1457, %v1743, -inf
        %1766 = vmax.xlane.f32.xlu0 %v1765
        %v1767 = vpop.xlane.xlu0 %1766
        %v1768 = vsub.f32 %v1736, %v1746
        %v1769 = vsub.f32 %v1737, %v1749
        %v1770 = vsub.f32 %v1738, %v1752
        %v1771 = vsub.f32 %v1739, %v1755
        %v1772 = vsub.f32 %v1740, %v1758
        %v1773 = vsub.f32 %v1741, %v1761
        %v1774 = vsub.f32 %v1742, %v1764
        %v1775 = vsub.f32 %v1743, %v1767
        %v1776 = vmul.f32 %v1768, 1.442695
        %v1777 = vpow.pop %v1776
        %v1778 = vmul.f32 %v1769, 1.442695
        %v1779 = vpow.pop %v1778
        %v1780 = vmul.f32 %v1770, 1.442695
        %v1781 = vpow.pop %v1780
        %v1782 = vmul.f32 %v1771, 1.442695
        %v1783 = vpow.pop %v1782
        %v1784 = vmul.f32 %v1772, 1.442695
        %v1785 = vpow.pop %v1784
        %v1786 = vmul.f32 %v1773, 1.442695
        %v1787 = vpow.pop %v1786
        %v1788 = vmul.f32 %v1774, 1.442695
        %v1789 = vpow.pop %v1788
        %v1790 = vmul.f32 %v1775, 1.442695
        %v1791 = vpow.pop %v1790
        %v1792 = vsel %vm1457, %v1777, 0.0
        %1793 = vadd.xlane.f32.xlu0 %v1792
        %v1794 = vpop.xlane.xlu0 %1793
        %v1795 = vsel %vm1457, %v1779, 0.0
        %1796 = vadd.xlane.f32.xlu0 %v1795
        %v1797 = vpop.xlane.xlu0 %1796
        %v1798 = vsel %vm1457, %v1781, 0.0
        %1799 = vadd.xlane.f32.xlu0 %v1798
        %v1800 = vpop.xlane.xlu0 %1799
        %v1801 = vsel %vm1457, %v1783, 0.0
        %1802 = vadd.xlane.f32.xlu0 %v1801
        %v1803 = vpop.xlane.xlu0 %1802
        %v1804 = vsel %vm1457, %v1785, 0.0
        %1805 = vadd.xlane.f32.xlu0 %v1804
        %v1806 = vpop.xlane.xlu0 %1805
        %v1807 = vsel %vm1457, %v1787, 0.0
        %1808 = vadd.xlane.f32.xlu0 %v1807
        %v1809 = vpop.xlane.xlu0 %1808
        %v1810 = vsel %vm1457, %v1789, 0.0
        %1811 = vadd.xlane.f32.xlu0 %v1810
        %v1812 = vpop.xlane.xlu0 %1811
        %v1813 = vsel %vm1457, %v1791, 0.0
        %1814 = vadd.xlane.f32.xlu0 %v1813
        %v1815 = vpop.xlane.xlu0 %1814
        %v1816 = vrcp.pop %v1794
        %v1817 = vrcp.pop %v1797
        %v1818 = vrcp.pop %v1800
        %v1819 = vrcp.pop %v1803
        %v1820 = vrcp.pop %v1806
        %v1821 = vrcp.pop %v1809
        %v1822 = vrcp.pop %v1812
        %v1823 = vrcp.pop %v1815
        %v1824 = vmul.f32 %v1777, %v1816
        %v1825 = vmul.f32 %v1779, %v1817
        %v1826 = vmul.f32 %v1781, %v1818
        %v1827 = vmul.f32 %v1783, %v1819
        %v1828 = vmul.f32 %v1785, %v1820
        %v1829 = vmul.f32 %v1787, %v1821
        %v1830 = vmul.f32 %v1789, %v1822
        %v1831 = vmul.f32 %v1791, %v1823
        %v1832 = vpack.c.bf16 %v1825, %v1824
        %v1833 = vpack.c.bf16 %v1827, %v1826
        %v1834 = vpack.c.bf16 %v1829, %v1828
        %v1835 = vpack.c.bf16 %v1831, %v1830
        %v1836 = vpack.c.bf16 %v1661, %v1660
        %v1837 = vpack.c.bf16 %v1663, %v1662
        %v1838 = vpack.c.bf16 %v1665, %v1664
        %v1839 = vpack.c.bf16 %v1667, %v1666
        %v1841 = vsel %vm1457, %v1832, 0
        %v1844 = vsel %vm1457, %v1833, 0
        %v1847 = vsel %vm1457, %v1834, 0
        %v1850 = vsel %vm1457, %v1835, 0
        %1852 = vmatprep.subr.bf16.mxu0 0
        %1853 = vmatpush1.bf16.msra.mxu0 0
        %1854 = vmatprep.subr.bf16.mxu0 0
        %1855 = vmatpush1.bf16.msra.mxu0 0
        %1856 = vmatprep.subr.bf16.mxu0 0
        %1857 = vmatpush1.bf16.msra.mxu0 0
        %1858 = vmatprep.subr.bf16.mxu0 0
        %1859 = vmatpush1.bf16.msra.mxu0 0
        %1860 = vmatprep.subr.bf16.mxu0 0
        %1861 = vmatpush1.bf16.msra.mxu0 %v1839
        %1862 = vmatprep.subr.bf16.mxu0 0
        %1863 = vmatpush1.bf16.msra.mxu0 %v1838
        %1864 = vmatprep.subr.bf16.mxu0 0
        %1865 = vmatpush1.bf16.msra.mxu0 %v1837
        %1866 = vmatprep.subr.bf16.mxu0 0
        %1867 = vmatpush1.bf16.msra.mxu0 %v1836
        %1868 = vmatprep.subr.bf16.mxu0 0
        %1869 = vmatpush2.bf16.msra.mxu0 0
        %1870 = vmatprep.subr.bf16.mxu0 0
        %1871 = vmatpush2.bf16.msra.mxu0 0
        %1872 = vmatprep.subr.bf16.mxu0 0
        %1873 = vmatpush2.bf16.msra.mxu0 0
        %1874 = vmatprep.subr.bf16.mxu0 0
        %1875 = vmatpush2.bf16.msra.mxu0 0
        %1876 = vmatprep.subr.bf16.mxu0 0
        %1877 = vmatpush2.bf16.msra.mxu0 0
        %1878 = vmatprep.subr.bf16.mxu0 0
        %1879 = vmatpush2.bf16.msra.mxu0 0
        %1880 = vmatprep.subr.bf16.mxu0 0
        %1881 = vmatpush2.bf16.msra.mxu0 0
        %1882 = vmatprep.subr.bf16.mxu0 0
        %1883 = vmatpush2.bf16.msra.mxu0 0
        %1884 = vmatprep.mubr.bf16.mxu0 0
        %1885 = vmatmul.mubr.bf16.gmra.mxu0 %v1841
        %v1886 = vpop.f32.mrf.mxu0
        %v1887 = vadd.f32 %v1668, %v1886
        %v1888 = vpop.f32.mrf.mxu0
        %v1889 = vpop.f32.mrf.mxu0
        %v1890 = vadd.f32 %v1669, %v1889
        %v1891 = vpop.f32.mrf.mxu0
        %1892 = vmatprep.mubr.bf16.mxu0 0
        %1893 = vmatmul.mubr.bf16.gmra.mxu0 %v1844
        %v1894 = vpop.f32.mrf.mxu0
        %v1895 = vadd.f32 %v1670, %v1894
        %v1896 = vpop.f32.mrf.mxu0
        %v1897 = vpop.f32.mrf.mxu0
        %v1898 = vadd.f32 %v1671, %v1897
        %v1899 = vpop.f32.mrf.mxu0
        %1900 = vmatprep.mubr.bf16.mxu0 0
        %1901 = vmatmul.mubr.bf16.gmra.mxu0 %v1847
        %v1902 = vpop.f32.mrf.mxu0
        %v1903 = vadd.f32 %v1672, %v1902
        %v1904 = vpop.f32.mrf.mxu0
        %v1905 = vpop.f32.mrf.mxu0
        %v1906 = vadd.f32 %v1673, %v1905
        %v1907 = vpop.f32.mrf.mxu0
        %1908 = vmatprep.mubr.bf16.mxu0 0
        %1909 = vmatmul.mubr.bf16.gmra.mxu0 %v1850
        %v1910 = vpop.f32.mrf.mxu0
        %v1911 = vadd.f32 %v1674, %v1910
        %v1912 = vpop.f32.mrf.mxu0
        %v1913 = vpop.f32.mrf.mxu0
        %v1914 = vadd.f32 %v1675, %v1913
        %v1915 = vpop.f32.mrf.mxu0
        %1916 = vdwg.mxu0
        %v1917 = vlaneseq
        %v1918 = vshrl.u32 %v1917, 7
        %v1919 = vsub.s32 1, %v1918
        %v1920 = vrot.slane %v1362, %v1919
        %v1921 = vadd.f32 %v1887, %v1920
        %v1922 = vadd.f32 %v1890, %v1920
        %v1923 = vadd.f32 %v1895, %v1920
        %v1924 = vadd.f32 %v1898, %v1920
        %v1925 = vadd.f32 %v1903, %v1920
        %v1926 = vadd.f32 %v1906, %v1920
        %v1927 = vadd.f32 %v1911, %v1920
        %v1928 = vadd.f32 %v1914, %v1920
        %v1929 = vmax.f32 %v1921, %v1643
        %v1930 = vmax.f32 %v1922, %v1643
        %v1931 = vmax.f32 %v1923, %v1643
        %v1932 = vmax.f32 %v1924, %v1643
        %v1933 = vmax.f32 %v1925, %v1643
        %v1934 = vmax.f32 %v1926, %v1643
        %v1935 = vmax.f32 %v1927, %v1643
        %v1936 = vmax.f32 %v1928, %v1643
        %v1937 = vadd.f32 %v1652, %v1929
        %v1938 = vadd.f32 %v1653, %v1930
        %v1939 = vadd.f32 %v1654, %v1931
        %v1940 = vadd.f32 %v1655, %v1932
        %v1941 = vadd.f32 %v1656, %v1933
        %v1942 = vadd.f32 %v1657, %v1934
        %v1943 = vadd.f32 %v1658, %v1935
        %v1944 = vadd.f32 %v1659, %v1936
        %v1945 = vld [vmem:[#allocation2 + $0x10] sm:$0xff]
        %v1946 = vld [vmem:[#allocation2 + $0x68] sm:$0xff]
        %v1947 = vld [vmem:[#allocation2 + $0xc0] sm:$0xff]
        %v1948 = vld [vmem:[#allocation2 + $0x118] sm:$0xff]
        %v1949 = vld [vmem:[#allocation2 + $0x170] sm:$0xff]
        %v1950 = vld [vmem:[#allocation2 + $0x1c8] sm:$0xff]
        %v1951 = vld [vmem:[#allocation2 + $0x220] sm:$0xff]
        %v1952 = vld [vmem:[#allocation2 + $0x278] sm:$0xff]
        %v1953 = vld [vmem:[#allocation2 + $0x38] sm:$0xff]
        %v1954 = vld [vmem:[#allocation2 + $0x90] sm:$0xff]
        %v1955 = vld [vmem:[#allocation2 + $0xe8] sm:$0xff]
        %v1956 = vld [vmem:[#allocation2 + $0x140] sm:$0xff]
        %v1957 = vld [vmem:[#allocation2 + $0x198] sm:$0xff]
        %v1958 = vld [vmem:[#allocation2 + $0x1f0] sm:$0xff]
        %v1959 = vld [vmem:[#allocation2 + $0x248] sm:$0xff]
        %v1960 = vld [vmem:[#allocation2 + $0x2a0] sm:$0xff]
        %v1961 = vlaneseq
        %v1962 = vshrl.u32 %v1961, 7
        %v1963 = vsub.s32 2, %v1962
        %v1964 = vrot.slane %v1349, %v1963
        %1965 = vset.pattern.permute.xlu0 2
        %1966 = vperm.xlu0 %1965, %v1354
        %v1967 = vpop.permute.xlu0 %1966
        %1969 = vset.pattern.permute.xlu0 2
        %1970 = vperm.xlu0 %1969, %v1355
        %v1971 = vpop.permute.xlu0 %1970
        %1973 = vset.pattern.permute.xlu0 2
        %1974 = vperm.xlu0 %1973, %v1356
        %v1975 = vpop.permute.xlu0 %1974
        %1977 = vset.pattern.permute.xlu0 2
        %1978 = vperm.xlu0 %1977, %v1357
        %v1979 = vpop.permute.xlu0 %1978
        %1981 = vset.pattern.permute.xlu0 2
        %1982 = vperm.xlu0 %1981, %v1358
        %v1983 = vpop.permute.xlu0 %1982
        %1985 = vset.pattern.permute.xlu0 2
        %1986 = vperm.xlu0 %1985, %v1359
        %v1987 = vpop.permute.xlu0 %1986
        %1989 = vset.pattern.permute.xlu0 2
        %1990 = vperm.xlu0 %1989, %v1360
        %v1991 = vpop.permute.xlu0 %1990
        %1993 = vset.pattern.permute.xlu0 2
        %1994 = vperm.xlu0 %1993, %v1361
        %v1995 = vpop.permute.xlu0 %1994
        %v1997 = vadd.f32 %v1964, %v1967
        %v1998 = vadd.f32 %v1964, %v1971
        %v1999 = vadd.f32 %v1964, %v1975
        %v2000 = vadd.f32 %v1964, %v1979
        %v2001 = vadd.f32 %v1964, %v1983
        %v2002 = vadd.f32 %v1964, %v1987
        %v2003 = vadd.f32 %v1964, %v1991
        %v2004 = vadd.f32 %v1964, %v1995
        %vm2005 = vcmp.gt.f32.partialorder %v1997, 0.0
        %vm2006 = vcmp.gt.f32.partialorder %v1998, 0.0
        %vm2007 = vcmp.gt.f32.partialorder %v1999, 0.0
        %vm2008 = vcmp.gt.f32.partialorder %v2000, 0.0
        %vm2009 = vcmp.gt.f32.partialorder %v2001, 0.0
        %vm2010 = vcmp.gt.f32.partialorder %v2002, 0.0
        %vm2011 = vcmp.gt.f32.partialorder %v2003, 0.0
        %vm2012 = vcmp.gt.f32.partialorder %v2004, 0.0
        %v2013 = vmul.f32 %v1997, 0.2
        %v2014 = vmul.f32 %v1998, 0.2
        %v2015 = vmul.f32 %v1999, 0.2
        %v2016 = vmul.f32 %v2000, 0.2
        %v2017 = vmul.f32 %v2001, 0.2
        %v2018 = vmul.f32 %v2002, 0.2
        %v2019 = vmul.f32 %v2003, 0.2
        %v2020 = vmul.f32 %v2004, 0.2
        %v2021 = vsel %vm2005, %v1997, %v2013
        %v2022 = vsel %vm2006, %v1998, %v2014
        %v2023 = vsel %vm2007, %v1999, %v2015
        %v2024 = vsel %vm2008, %v2000, %v2016
        %v2025 = vsel %vm2009, %v2001, %v2017
        %v2026 = vsel %vm2010, %v2002, %v2018
        %v2027 = vsel %vm2011, %v2003, %v2019
        %v2028 = vsel %vm2012, %v2004, %v2020
        %v2029 = vsel %vm1457, %v2021, -inf
        %2030 = vmax.xlane.f32.xlu0 %v2029
        %v2031 = vpop.xlane.xlu0 %2030
        %v2032 = vsel %vm1457, %v2022, -inf
        %2033 = vmax.xlane.f32.xlu0 %v2032
        %v2034 = vpop.xlane.xlu0 %2033
        %v2035 = vsel %vm1457, %v2023, -inf
        %2036 = vmax.xlane.f32.xlu0 %v2035
        %v2037 = vpop.xlane.xlu0 %2036
        %v2038 = vsel %vm1457, %v2024, -inf
        %2039 = vmax.xlane.f32.xlu0 %v2038
        %v2040 = vpop.xlane.xlu0 %2039
        %v2041 = vsel %vm1457, %v2025, -inf
        %2042 = vmax.xlane.f32.xlu0 %v2041
        %v2043 = vpop.xlane.xlu0 %2042
        %v2044 = vsel %vm1457, %v2026, -inf
        %2045 = vmax.xlane.f32.xlu0 %v2044
        %v2046 = vpop.xlane.xlu0 %2045
        %v2047 = vsel %vm1457, %v2027, -inf
        %2048 = vmax.xlane.f32.xlu0 %v2047
        %v2049 = vpop.xlane.xlu0 %2048
        %v2050 = vsel %vm1457, %v2028, -inf
        %2051 = vmax.xlane.f32.xlu0 %v2050
        %v2052 = vpop.xlane.xlu0 %2051
        %v2053 = vsub.f32 %v2021, %v2031
        %v2054 = vsub.f32 %v2022, %v2034
        %v2055 = vsub.f32 %v2023, %v2037
        %v2056 = vsub.f32 %v2024, %v2040
        %v2057 = vsub.f32 %v2025, %v2043
        %v2058 = vsub.f32 %v2026, %v2046
        %v2059 = vsub.f32 %v2027, %v2049
        %v2060 = vsub.f32 %v2028, %v2052
        %v2061 = vmul.f32 %v2053, 1.442695
        %v2062 = vpow.pop %v2061
        %v2063 = vmul.f32 %v2054, 1.442695
        %v2064 = vpow.pop %v2063
        %v2065 = vmul.f32 %v2055, 1.442695
        %v2066 = vpow.pop %v2065
        %v2067 = vmul.f32 %v2056, 1.442695
        %v2068 = vpow.pop %v2067
        %v2069 = vmul.f32 %v2057, 1.442695
        %v2070 = vpow.pop %v2069
        %v2071 = vmul.f32 %v2058, 1.442695
        %v2072 = vpow.pop %v2071
        %v2073 = vmul.f32 %v2059, 1.442695
        %v2074 = vpow.pop %v2073
        %v2075 = vmul.f32 %v2060, 1.442695
        %v2076 = vpow.pop %v2075
        %v2077 = vsel %vm1457, %v2062, 0.0
        %2078 = vadd.xlane.f32.xlu0 %v2077
        %v2079 = vpop.xlane.xlu0 %2078
        %v2080 = vsel %vm1457, %v2064, 0.0
        %2081 = vadd.xlane.f32.xlu0 %v2080
        %v2082 = vpop.xlane.xlu0 %2081
        %v2083 = vsel %vm1457, %v2066, 0.0
        %2084 = vadd.xlane.f32.xlu0 %v2083
        %v2085 = vpop.xlane.xlu0 %2084
        %v2086 = vsel %vm1457, %v2068, 0.0
        %2087 = vadd.xlane.f32.xlu0 %v2086
        %v2088 = vpop.xlane.xlu0 %2087
        %v2089 = vsel %vm1457, %v2070, 0.0
        %2090 = vadd.xlane.f32.xlu0 %v2089
        %v2091 = vpop.xlane.xlu0 %2090
        %v2092 = vsel %vm1457, %v2072, 0.0
        %2093 = vadd.xlane.f32.xlu0 %v2092
        %v2094 = vpop.xlane.xlu0 %2093
        %v2095 = vsel %vm1457, %v2074, 0.0
        %2096 = vadd.xlane.f32.xlu0 %v2095
        %v2097 = vpop.xlane.xlu0 %2096
        %v2098 = vsel %vm1457, %v2076, 0.0
        %2099 = vadd.xlane.f32.xlu0 %v2098
        %v2100 = vpop.xlane.xlu0 %2099
        %v2101 = vrcp.pop %v2079
        %v2102 = vrcp.pop %v2082
        %v2103 = vrcp.pop %v2085
        %v2104 = vrcp.pop %v2088
        %v2105 = vrcp.pop %v2091
        %v2106 = vrcp.pop %v2094
        %v2107 = vrcp.pop %v2097
        %v2108 = vrcp.pop %v2100
        %v2109 = vmul.f32 %v2062, %v2101
        %v2110 = vmul.f32 %v2064, %v2102
        %v2111 = vmul.f32 %v2066, %v2103
        %v2112 = vmul.f32 %v2068, %v2104
        %v2113 = vmul.f32 %v2070, %v2105
        %v2114 = vmul.f32 %v2072, %v2106
        %v2115 = vmul.f32 %v2074, %v2107
        %v2116 = vmul.f32 %v2076, %v2108
        %v2117 = vpack.c.bf16 %v2110, %v2109
        %v2118 = vpack.c.bf16 %v2112, %v2111
        %v2119 = vpack.c.bf16 %v2114, %v2113
        %v2120 = vpack.c.bf16 %v2116, %v2115
        %v2121 = vpack.c.bf16 %v1946, %v1945
        %v2122 = vpack.c.bf16 %v1948, %v1947
        %v2123 = vpack.c.bf16 %v1950, %v1949
        %v2124 = vpack.c.bf16 %v1952, %v1951
        %v2126 = vsel %vm1457, %v2117, 0
        %v2129 = vsel %vm1457, %v2118, 0
        %v2132 = vsel %vm1457, %v2119, 0
        %v2135 = vsel %vm1457, %v2120, 0
        %2137 = vmatprep.subr.bf16.mxu0 0
        %2138 = vmatpush1.bf16.msra.mxu0 0
        %2139 = vmatprep.subr.bf16.mxu0 0
        %2140 = vmatpush1.bf16.msra.mxu0 0
        %2141 = vmatprep.subr.bf16.mxu0 0
        %2142 = vmatpush1.bf16.msra.mxu0 0
        %2143 = vmatprep.subr.bf16.mxu0 0
        %2144 = vmatpush1.bf16.msra.mxu0 0
        %2145 = vmatprep.subr.bf16.mxu0 0
        %2146 = vmatpush1.bf16.msra.mxu0 %v2124
        %2147 = vmatprep.subr.bf16.mxu0 0
        %2148 = vmatpush1.bf16.msra.mxu0 %v2123
        %2149 = vmatprep.subr.bf16.mxu0 0
        %2150 = vmatpush1.bf16.msra.mxu0 %v2122
        %2151 = vmatprep.subr.bf16.mxu0 0
        %2152 = vmatpush1.bf16.msra.mxu0 %v2121
        %2153 = vmatprep.subr.bf16.mxu0 0
        %2154 = vmatpush2.bf16.msra.mxu0 0
        %2155 = vmatprep.subr.bf16.mxu0 0
        %2156 = vmatpush2.bf16.msra.mxu0 0
        %2157 = vmatprep.subr.bf16.mxu0 0
        %2158 = vmatpush2.bf16.msra.mxu0 0
        %2159 = vmatprep.subr.bf16.mxu0 0
        %2160 = vmatpush2.bf16.msra.mxu0 0
        %2161 = vmatprep.subr.bf16.mxu0 0
        %2162 = vmatpush2.bf16.msra.mxu0 0
        %2163 = vmatprep.subr.bf16.mxu0 0
        %2164 = vmatpush2.bf16.msra.mxu0 0
        %2165 = vmatprep.subr.bf16.mxu0 0
        %2166 = vmatpush2.bf16.msra.mxu0 0
        %2167 = vmatprep.subr.bf16.mxu0 0
        %2168 = vmatpush2.bf16.msra.mxu0 0
        %2169 = vmatprep.mubr.bf16.mxu0 0
        %2170 = vmatmul.mubr.bf16.gmra.mxu0 %v2126
        %v2171 = vpop.f32.mrf.mxu0
        %v2172 = vadd.f32 %v1953, %v2171
        %v2173 = vpop.f32.mrf.mxu0
        %v2174 = vpop.f32.mrf.mxu0
        %v2175 = vadd.f32 %v1954, %v2174
        %v2176 = vpop.f32.mrf.mxu0
        %2177 = vmatprep.mubr.bf16.mxu0 0
        %2178 = vmatmul.mubr.bf16.gmra.mxu0 %v2129
        %v2179 = vpop.f32.mrf.mxu0
        %v2180 = vadd.f32 %v1955, %v2179
        %v2181 = vpop.f32.mrf.mxu0
        %v2182 = vpop.f32.mrf.mxu0
        %v2183 = vadd.f32 %v1956, %v2182
        %v2184 = vpop.f32.mrf.mxu0
        %2185 = vmatprep.mubr.bf16.mxu0 0
        %2186 = vmatmul.mubr.bf16.gmra.mxu0 %v2132
        %v2187 = vpop.f32.mrf.mxu0
        %v2188 = vadd.f32 %v1957, %v2187
        %v2189 = vpop.f32.mrf.mxu0
        %v2190 = vpop.f32.mrf.mxu0
        %v2191 = vadd.f32 %v1958, %v2190
        %v2192 = vpop.f32.mrf.mxu0
        %2193 = vmatprep.mubr.bf16.mxu0 0
        %2194 = vmatmul.mubr.bf16.gmra.mxu0 %v2135
        %v2195 = vpop.f32.mrf.mxu0
        %v2196 = vadd.f32 %v1959, %v2195
        %v2197 = vpop.f32.mrf.mxu0
        %v2198 = vpop.f32.mrf.mxu0
        %v2199 = vadd.f32 %v1960, %v2198
        %v2200 = vpop.f32.mrf.mxu0
        %2201 = vdwg.mxu0
        %v2202 = vlaneseq
        %v2203 = vshrl.u32 %v2202, 7
        %v2204 = vsub.s32 2, %v2203
        %v2205 = vrot.slane %v1362, %v2204
        %v2206 = vadd.f32 %v2172, %v2205
        %v2207 = vadd.f32 %v2175, %v2205
        %v2208 = vadd.f32 %v2180, %v2205
        %v2209 = vadd.f32 %v2183, %v2205
        %v2210 = vadd.f32 %v2188, %v2205
        %v2211 = vadd.f32 %v2191, %v2205
        %v2212 = vadd.f32 %v2196, %v2205
        %v2213 = vadd.f32 %v2199, %v2205
        %v2214 = vmax.f32 %v2206, %v1643
        %v2215 = vmax.f32 %v2207, %v1643
        %v2216 = vmax.f32 %v2208, %v1643
        %v2217 = vmax.f32 %v2209, %v1643
        %v2218 = vmax.f32 %v2210, %v1643
        %v2219 = vmax.f32 %v2211, %v1643
        %v2220 = vmax.f32 %v2212, %v1643
        %v2221 = vmax.f32 %v2213, %v1643
        %v2222 = vadd.f32 %v1937, %v2214
        %v2223 = vadd.f32 %v1938, %v2215
        %v2224 = vadd.f32 %v1939, %v2216
        %v2225 = vadd.f32 %v1940, %v2217
        %v2226 = vadd.f32 %v1941, %v2218
        %v2227 = vadd.f32 %v1942, %v2219
        %v2228 = vadd.f32 %v1943, %v2220
        %v2229 = vadd.f32 %v1944, %v2221
        %v2230 = vld [vmem:[#allocation2 + $0x18] sm:$0xff]
        %v2231 = vld [vmem:[#allocation2 + $0x70] sm:$0xff]
        %v2232 = vld [vmem:[#allocation2 + $0xc8] sm:$0xff]
        %v2233 = vld [vmem:[#allocation2 + $0x120] sm:$0xff]
        %v2234 = vld [vmem:[#allocation2 + $0x178] sm:$0xff]
        %v2235 = vld [vmem:[#allocation2 + $0x1d0] sm:$0xff]
        %v2236 = vld [vmem:[#allocation2 + $0x228] sm:$0xff]
        %v2237 = vld [vmem:[#allocation2 + $0x280] sm:$0xff]
        %v2238 = vld [vmem:[#allocation2 + $0x40] sm:$0xff]
        %v2239 = vld [vmem:[#allocation2 + $0x98] sm:$0xff]
        %v2240 = vld [vmem:[#allocation2 + $0xf0] sm:$0xff]
        %v2241 = vld [vmem:[#allocation2 + $0x148] sm:$0xff]
        %v2242 = vld [vmem:[#allocation2 + $0x1a0] sm:$0xff]
        %v2243 = vld [vmem:[#allocation2 + $0x1f8] sm:$0xff]
        %v2244 = vld [vmem:[#allocation2 + $0x250] sm:$0xff]
        %v2245 = vld [vmem:[#allocation2 + $0x2a8] sm:$0xff]
        %v2246 = vlaneseq
        %v2247 = vshrl.u32 %v2246, 7
        %v2248 = vsub.s32 3, %v2247
        %v2249 = vrot.slane %v1349, %v2248
        %2250 = vset.pattern.permute.xlu0 3
        %2251 = vperm.xlu0 %2250, %v1354
        %v2252 = vpop.permute.xlu0 %2251
        %2254 = vset.pattern.permute.xlu0 3
        %2255 = vperm.xlu0 %2254, %v1355
        %v2256 = vpop.permute.xlu0 %2255
        %2258 = vset.pattern.permute.xlu0 3
        %2259 = vperm.xlu0 %2258, %v1356
        %v2260 = vpop.permute.xlu0 %2259
        %2262 = vset.pattern.permute.xlu0 3
        %2263 = vperm.xlu0 %2262, %v1357
        %v2264 = vpop.permute.xlu0 %2263
        %2266 = vset.pattern.permute.xlu0 3
        %2267 = vperm.xlu0 %2266, %v1358
        %v2268 = vpop.permute.xlu0 %2267
        %2270 = vset.pattern.permute.xlu0 3
        %2271 = vperm.xlu0 %2270, %v1359
        %v2272 = vpop.permute.xlu0 %2271
        %2274 = vset.pattern.permute.xlu0 3
        %2275 = vperm.xlu0 %2274, %v1360
        %v2276 = vpop.permute.xlu0 %2275
        %2278 = vset.pattern.permute.xlu0 3
        %2279 = vperm.xlu0 %2278, %v1361
        %v2280 = vpop.permute.xlu0 %2279
        %v2282 = vadd.f32 %v2249, %v2252
        %v2283 = vadd.f32 %v2249, %v2256
        %v2284 = vadd.f32 %v2249, %v2260
        %v2285 = vadd.f32 %v2249, %v2264
        %v2286 = vadd.f32 %v2249, %v2268
        %v2287 = vadd.f32 %v2249, %v2272
        %v2288 = vadd.f32 %v2249, %v2276
        %v2289 = vadd.f32 %v2249, %v2280
        %vm2290 = vcmp.gt.f32.partialorder %v2282, 0.0
        %vm2291 = vcmp.gt.f32.partialorder %v2283, 0.0
        %vm2292 = vcmp.gt.f32.partialorder %v2284, 0.0
        %vm2293 = vcmp.gt.f32.partialorder %v2285, 0.0
        %vm2294 = vcmp.gt.f32.partialorder %v2286, 0.0
        %vm2295 = vcmp.gt.f32.partialorder %v2287, 0.0
        %vm2296 = vcmp.gt.f32.partialorder %v2288, 0.0
        %vm2297 = vcmp.gt.f32.partialorder %v2289, 0.0
        %v2298 = vmul.f32 %v2282, 0.2
        %v2299 = vmul.f32 %v2283, 0.2
        %v2300 = vmul.f32 %v2284, 0.2
        %v2301 = vmul.f32 %v2285, 0.2
        %v2302 = vmul.f32 %v2286, 0.2
        %v2303 = vmul.f32 %v2287, 0.2
        %v2304 = vmul.f32 %v2288, 0.2
        %v2305 = vmul.f32 %v2289, 0.2
        %v2306 = vsel %vm2290, %v2282, %v2298
        %v2307 = vsel %vm2291, %v2283, %v2299
        %v2308 = vsel %vm2292, %v2284, %v2300
        %v2309 = vsel %vm2293, %v2285, %v2301
        %v2310 = vsel %vm2294, %v2286, %v2302
        %v2311 = vsel %vm2295, %v2287, %v2303
        %v2312 = vsel %vm2296, %v2288, %v2304
        %v2313 = vsel %vm2297, %v2289, %v2305
        %v2314 = vsel %vm1457, %v2306, -inf
        %2315 = vmax.xlane.f32.xlu0 %v2314
        %v2316 = vpop.xlane.xlu0 %2315
        %v2317 = vsel %vm1457, %v2307, -inf
        %2318 = vmax.xlane.f32.xlu0 %v2317
        %v2319 = vpop.xlane.xlu0 %2318
        %v2320 = vsel %vm1457, %v2308, -inf
        %2321 = vmax.xlane.f32.xlu0 %v2320
        %v2322 = vpop.xlane.xlu0 %2321
        %v2323 = vsel %vm1457, %v2309, -inf
        %2324 = vmax.xlane.f32.xlu0 %v2323
        %v2325 = vpop.xlane.xlu0 %2324
        %v2326 = vsel %vm1457, %v2310, -inf
        %2327 = vmax.xlane.f32.xlu0 %v2326
        %v2328 = vpop.xlane.xlu0 %2327
        %v2329 = vsel %vm1457, %v2311, -inf
        %2330 = vmax.xlane.f32.xlu0 %v2329
        %v2331 = vpop.xlane.xlu0 %2330
        %v2332 = vsel %vm1457, %v2312, -inf
        %2333 = vmax.xlane.f32.xlu0 %v2332
        %v2334 = vpop.xlane.xlu0 %2333
        %v2335 = vsel %vm1457, %v2313, -inf
        %2336 = vmax.xlane.f32.xlu0 %v2335
        %v2337 = vpop.xlane.xlu0 %2336
        %v2338 = vsub.f32 %v2306, %v2316
        %v2339 = vsub.f32 %v2307, %v2319
        %v2340 = vsub.f32 %v2308, %v2322
        %v2341 = vsub.f32 %v2309, %v2325
        %v2342 = vsub.f32 %v2310, %v2328
        %v2343 = vsub.f32 %v2311, %v2331
        %v2344 = vsub.f32 %v2312, %v2334
        %v2345 = vsub.f32 %v2313, %v2337
        %v2346 = vmul.f32 %v2338, 1.442695
        %v2347 = vpow.pop %v2346
        %v2348 = vmul.f32 %v2339, 1.442695
        %v2349 = vpow.pop %v2348
        %v2350 = vmul.f32 %v2340, 1.442695
        %v2351 = vpow.pop %v2350
        %v2352 = vmul.f32 %v2341, 1.442695
        %v2353 = vpow.pop %v2352
        %v2354 = vmul.f32 %v2342, 1.442695
        %v2355 = vpow.pop %v2354
        %v2356 = vmul.f32 %v2343, 1.442695
        %v2357 = vpow.pop %v2356
        %v2358 = vmul.f32 %v2344, 1.442695
        %v2359 = vpow.pop %v2358
        %v2360 = vmul.f32 %v2345, 1.442695
        %v2361 = vpow.pop %v2360
        %v2362 = vsel %vm1457, %v2347, 0.0
        %2363 = vadd.xlane.f32.xlu0 %v2362
        %v2364 = vpop.xlane.xlu0 %2363
        %v2365 = vsel %vm1457, %v2349, 0.0
        %2366 = vadd.xlane.f32.xlu0 %v2365
        %v2367 = vpop.xlane.xlu0 %2366
        %v2368 = vsel %vm1457, %v2351, 0.0
        %2369 = vadd.xlane.f32.xlu0 %v2368
        %v2370 = vpop.xlane.xlu0 %2369
        %v2371 = vsel %vm1457, %v2353, 0.0
        %2372 = vadd.xlane.f32.xlu0 %v2371
        %v2373 = vpop.xlane.xlu0 %2372
        %v2374 = vsel %vm1457, %v2355, 0.0
        %2375 = vadd.xlane.f32.xlu0 %v2374
        %v2376 = vpop.xlane.xlu0 %2375
        %v2377 = vsel %vm1457, %v2357, 0.0
        %2378 = vadd.xlane.f32.xlu0 %v2377
        %v2379 = vpop.xlane.xlu0 %2378
        %v2380 = vsel %vm1457, %v2359, 0.0
        %2381 = vadd.xlane.f32.xlu0 %v2380
        %v2382 = vpop.xlane.xlu0 %2381
        %v2383 = vsel %vm1457, %v2361, 0.0
        %2384 = vadd.xlane.f32.xlu0 %v2383
        %v2385 = vpop.xlane.xlu0 %2384
        %v2386 = vrcp.pop %v2364
        %v2387 = vrcp.pop %v2367
        %v2388 = vrcp.pop %v2370
        %v2389 = vrcp.pop %v2373
        %v2390 = vrcp.pop %v2376
        %v2391 = vrcp.pop %v2379
        %v2392 = vrcp.pop %v2382
        %v2393 = vrcp.pop %v2385
        %v2394 = vmul.f32 %v2347, %v2386
        %v2395 = vmul.f32 %v2349, %v2387
        %v2396 = vmul.f32 %v2351, %v2388
        %v2397 = vmul.f32 %v2353, %v2389
        %v2398 = vmul.f32 %v2355, %v2390
        %v2399 = vmul.f32 %v2357, %v2391
        %v2400 = vmul.f32 %v2359, %v2392
        %v2401 = vmul.f32 %v2361, %v2393
        %v2402 = vpack.c.bf16 %v2395, %v2394
        %v2403 = vpack.c.bf16 %v2397, %v2396
        %v2404 = vpack.c.bf16 %v2399, %v2398
        %v2405 = vpack.c.bf16 %v2401, %v2400
        %v2406 = vpack.c.bf16 %v2231, %v2230
        %v2407 = vpack.c.bf16 %v2233, %v2232
        %v2408 = vpack.c.bf16 %v2235, %v2234
        %v2409 = vpack.c.bf16 %v2237, %v2236
        %v2411 = vsel %vm1457, %v2402, 0
        %v2414 = vsel %vm1457, %v2403, 0
        %v2417 = vsel %vm1457, %v2404, 0
        %v2420 = vsel %vm1457, %v2405, 0
        %2422 = vmatprep.subr.bf16.mxu0 0
        %2423 = vmatpush1.bf16.msra.mxu0 0
        %2424 = vmatprep.subr.bf16.mxu0 0
        %2425 = vmatpush1.bf16.msra.mxu0 0
        %2426 = vmatprep.subr.bf16.mxu0 0
        %2427 = vmatpush1.bf16.msra.mxu0 0
        %2428 = vmatprep.subr.bf16.mxu0 0
        %2429 = vmatpush1.bf16.msra.mxu0 0
        %2430 = vmatprep.subr.bf16.mxu0 0
        %2431 = vmatpush1.bf16.msra.mxu0 %v2409
        %2432 = vmatprep.subr.bf16.mxu0 0
        %2433 = vmatpush1.bf16.msra.mxu0 %v2408
        %2434 = vmatprep.subr.bf16.mxu0 0
        %2435 = vmatpush1.bf16.msra.mxu0 %v2407
        %2436 = vmatprep.subr.bf16.mxu0 0
        %2437 = vmatpush1.bf16.msra.mxu0 %v2406
        %2438 = vmatprep.subr.bf16.mxu0 0
        %2439 = vmatpush2.bf16.msra.mxu0 0
        %2440 = vmatprep.subr.bf16.mxu0 0
        %2441 = vmatpush2.bf16.msra.mxu0 0
        %2442 = vmatprep.subr.bf16.mxu0 0
        %2443 = vmatpush2.bf16.msra.mxu0 0
        %2444 = vmatprep.subr.bf16.mxu0 0
        %2445 = vmatpush2.bf16.msra.mxu0 0
        %2446 = vmatprep.subr.bf16.mxu0 0
        %2447 = vmatpush2.bf16.msra.mxu0 0
        %2448 = vmatprep.subr.bf16.mxu0 0
        %2449 = vmatpush2.bf16.msra.mxu0 0
        %2450 = vmatprep.subr.bf16.mxu0 0
        %2451 = vmatpush2.bf16.msra.mxu0 0
        %2452 = vmatprep.subr.bf16.mxu0 0
        %2453 = vmatpush2.bf16.msra.mxu0 0
        %2454 = vmatprep.mubr.bf16.mxu0 0
        %2455 = vmatmul.mubr.bf16.gmra.mxu0 %v2411
        %v2456 = vpop.f32.mrf.mxu0
        %v2457 = vadd.f32 %v2238, %v2456
        %v2458 = vpop.f32.mrf.mxu0
        %v2459 = vpop.f32.mrf.mxu0
        %v2460 = vadd.f32 %v2239, %v2459
        %v2461 = vpop.f32.mrf.mxu0
        %2462 = vmatprep.mubr.bf16.mxu0 0
        %2463 = vmatmul.mubr.bf16.gmra.mxu0 %v2414
        %v2464 = vpop.f32.mrf.mxu0
        %v2465 = vadd.f32 %v2240, %v2464
        %v2466 = vpop.f32.mrf.mxu0
        %v2467 = vpop.f32.mrf.mxu0
        %v2468 = vadd.f32 %v2241, %v2467
        %v2469 = vpop.f32.mrf.mxu0
        %2470 = vmatprep.mubr.bf16.mxu0 0
        %2471 = vmatmul.mubr.bf16.gmra.mxu0 %v2417
        %v2472 = vpop.f32.mrf.mxu0
        %v2473 = vadd.f32 %v2242, %v2472
        %v2474 = vpop.f32.mrf.mxu0
        %v2475 = vpop.f32.mrf.mxu0
        %v2476 = vadd.f32 %v2243, %v2475
        %v2477 = vpop.f32.mrf.mxu0
        %2478 = vmatprep.mubr.bf16.mxu0 0
        %2479 = vmatmul.mubr.bf16.gmra.mxu0 %v2420
        %v2480 = vpop.f32.mrf.mxu0
        %v2481 = vadd.f32 %v2244, %v2480
        %v2482 = vpop.f32.mrf.mxu0
        %v2483 = vpop.f32.mrf.mxu0
        %v2484 = vadd.f32 %v2245, %v2483
        %v2485 = vpop.f32.mrf.mxu0
        %2486 = vdwg.mxu0
        %v2487 = vlaneseq
        %v2488 = vshrl.u32 %v2487, 7
        %v2489 = vsub.s32 3, %v2488
        %v2490 = vrot.slane %v1362, %v2489
        %v2491 = vadd.f32 %v2457, %v2490
        %v2492 = vadd.f32 %v2460, %v2490
        %v2493 = vadd.f32 %v2465, %v2490
        %v2494 = vadd.f32 %v2468, %v2490
        %v2495 = vadd.f32 %v2473, %v2490
        %v2496 = vadd.f32 %v2476, %v2490
        %v2497 = vadd.f32 %v2481, %v2490
        %v2498 = vadd.f32 %v2484, %v2490
        %v2499 = vmax.f32 %v2491, %v1643
        %v2500 = vmax.f32 %v2492, %v1643
        %v2501 = vmax.f32 %v2493, %v1643
        %v2502 = vmax.f32 %v2494, %v1643
        %v2503 = vmax.f32 %v2495, %v1643
        %v2504 = vmax.f32 %v2496, %v1643
        %v2505 = vmax.f32 %v2497, %v1643
        %v2506 = vmax.f32 %v2498, %v1643
        %v2507 = vadd.f32 %v2222, %v2499
        %v2508 = vadd.f32 %v2223, %v2500
        %v2509 = vadd.f32 %v2224, %v2501
        %v2510 = vadd.f32 %v2225, %v2502
        %v2511 = vadd.f32 %v2226, %v2503
        %v2512 = vadd.f32 %v2227, %v2504
        %v2513 = vadd.f32 %v2228, %v2505
        %v2514 = vadd.f32 %v2229, %v2506
        %v2515 = vld [vmem:[#allocation2 + $0x20] sm:$0xff]
        %v2516 = vld [vmem:[#allocation2 + $0x78] sm:$0xff]
        %v2517 = vld [vmem:[#allocation2 + $0xd0] sm:$0xff]
        %v2518 = vld [vmem:[#allocation2 + $0x128] sm:$0xff]
        %v2519 = vld [vmem:[#allocation2 + $0x180] sm:$0xff]
        %v2520 = vld [vmem:[#allocation2 + $0x1d8] sm:$0xff]
        %v2521 = vld [vmem:[#allocation2 + $0x230] sm:$0xff]
        %v2522 = vld [vmem:[#allocation2 + $0x288] sm:$0xff]
        %v2523 = vld [vmem:[#allocation2 + $0x48] sm:$0xff]
        %v2524 = vld [vmem:[#allocation2 + $0xa0] sm:$0xff]
        %v2525 = vld [vmem:[#allocation2 + $0xf8] sm:$0xff]
        %v2526 = vld [vmem:[#allocation2 + $0x150] sm:$0xff]
        %v2527 = vld [vmem:[#allocation2 + $0x1a8] sm:$0xff]
        %v2528 = vld [vmem:[#allocation2 + $0x200] sm:$0xff]
        %v2529 = vld [vmem:[#allocation2 + $0x258] sm:$0xff]
        %v2530 = vld [vmem:[#allocation2 + $0x2b0] sm:$0xff]
        %v2531 = vlaneseq
        %v2532 = vshrl.u32 %v2531, 7
        %v2533 = vsub.s32 4, %v2532
        %v2534 = vrot.slane %v1349, %v2533
        %2535 = vset.pattern.permute.xlu0 4
        %2536 = vperm.xlu0 %2535, %v1354
        %v2537 = vpop.permute.xlu0 %2536
        %2539 = vset.pattern.permute.xlu0 4
        %2540 = vperm.xlu0 %2539, %v1355
        %v2541 = vpop.permute.xlu0 %2540
        %2543 = vset.pattern.permute.xlu0 4
        %2544 = vperm.xlu0 %2543, %v1356
        %v2545 = vpop.permute.xlu0 %2544
        %2547 = vset.pattern.permute.xlu0 4
        %2548 = vperm.xlu0 %2547, %v1357
        %v2549 = vpop.permute.xlu0 %2548
        %2551 = vset.pattern.permute.xlu0 4
        %2552 = vperm.xlu0 %2551, %v1358
        %v2553 = vpop.permute.xlu0 %2552
        %2555 = vset.pattern.permute.xlu0 4
        %2556 = vperm.xlu0 %2555, %v1359
        %v2557 = vpop.permute.xlu0 %2556
        %2559 = vset.pattern.permute.xlu0 4
        %2560 = vperm.xlu0 %2559, %v1360
        %v2561 = vpop.permute.xlu0 %2560
        %2563 = vset.pattern.permute.xlu0 4
        %2564 = vperm.xlu0 %2563, %v1361
        %v2565 = vpop.permute.xlu0 %2564
        %v2567 = vadd.f32 %v2534, %v2537
        %v2568 = vadd.f32 %v2534, %v2541
        %v2569 = vadd.f32 %v2534, %v2545
        %v2570 = vadd.f32 %v2534, %v2549
        %v2571 = vadd.f32 %v2534, %v2553
        %v2572 = vadd.f32 %v2534, %v2557
        %v2573 = vadd.f32 %v2534, %v2561
        %v2574 = vadd.f32 %v2534, %v2565
        %vm2575 = vcmp.gt.f32.partialorder %v2567, 0.0
        %vm2576 = vcmp.gt.f32.partialorder %v2568, 0.0
        %vm2577 = vcmp.gt.f32.partialorder %v2569, 0.0
        %vm2578 = vcmp.gt.f32.partialorder %v2570, 0.0
        %vm2579 = vcmp.gt.f32.partialorder %v2571, 0.0
        %vm2580 = vcmp.gt.f32.partialorder %v2572, 0.0
        %vm2581 = vcmp.gt.f32.partialorder %v2573, 0.0
        %vm2582 = vcmp.gt.f32.partialorder %v2574, 0.0
        %v2583 = vmul.f32 %v2567, 0.2
        %v2584 = vmul.f32 %v2568, 0.2
        %v2585 = vmul.f32 %v2569, 0.2
        %v2586 = vmul.f32 %v2570, 0.2
        %v2587 = vmul.f32 %v2571, 0.2
        %v2588 = vmul.f32 %v2572, 0.2
        %v2589 = vmul.f32 %v2573, 0.2
        %v2590 = vmul.f32 %v2574, 0.2
        %v2591 = vsel %vm2575, %v2567, %v2583
        %v2592 = vsel %vm2576, %v2568, %v2584
        %v2593 = vsel %vm2577, %v2569, %v2585
        %v2594 = vsel %vm2578, %v2570, %v2586
        %v2595 = vsel %vm2579, %v2571, %v2587
        %v2596 = vsel %vm2580, %v2572, %v2588
        %v2597 = vsel %vm2581, %v2573, %v2589
        %v2598 = vsel %vm2582, %v2574, %v2590
        %v2599 = vsel %vm1457, %v2591, -inf
        %2600 = vmax.xlane.f32.xlu0 %v2599
        %v2601 = vpop.xlane.xlu0 %2600
        %v2602 = vsel %vm1457, %v2592, -inf
        %2603 = vmax.xlane.f32.xlu0 %v2602
        %v2604 = vpop.xlane.xlu0 %2603
        %v2605 = vsel %vm1457, %v2593, -inf
        %2606 = vmax.xlane.f32.xlu0 %v2605
        %v2607 = vpop.xlane.xlu0 %2606
        %v2608 = vsel %vm1457, %v2594, -inf
        %2609 = vmax.xlane.f32.xlu0 %v2608
        %v2610 = vpop.xlane.xlu0 %2609
        %v2611 = vsel %vm1457, %v2595, -inf
        %2612 = vmax.xlane.f32.xlu0 %v2611
        %v2613 = vpop.xlane.xlu0 %2612
        %v2614 = vsel %vm1457, %v2596, -inf
        %2615 = vmax.xlane.f32.xlu0 %v2614
        %v2616 = vpop.xlane.xlu0 %2615
        %v2617 = vsel %vm1457, %v2597, -inf
        %2618 = vmax.xlane.f32.xlu0 %v2617
        %v2619 = vpop.xlane.xlu0 %2618
        %v2620 = vsel %vm1457, %v2598, -inf
        %2621 = vmax.xlane.f32.xlu0 %v2620
        %v2622 = vpop.xlane.xlu0 %2621
        %v2623 = vsub.f32 %v2591, %v2601
        %v2624 = vsub.f32 %v2592, %v2604
        %v2625 = vsub.f32 %v2593, %v2607
        %v2626 = vsub.f32 %v2594, %v2610
        %v2627 = vsub.f32 %v2595, %v2613
        %v2628 = vsub.f32 %v2596, %v2616
        %v2629 = vsub.f32 %v2597, %v2619
        %v2630 = vsub.f32 %v2598, %v2622
        %v2631 = vmul.f32 %v2623, 1.442695
        %v2632 = vpow.pop %v2631
        %v2633 = vmul.f32 %v2624, 1.442695
        %v2634 = vpow.pop %v2633
        %v2635 = vmul.f32 %v2625, 1.442695
        %v2636 = vpow.pop %v2635
        %v2637 = vmul.f32 %v2626, 1.442695
        %v2638 = vpow.pop %v2637
        %v2639 = vmul.f32 %v2627, 1.442695
        %v2640 = vpow.pop %v2639
        %v2641 = vmul.f32 %v2628, 1.442695
        %v2642 = vpow.pop %v2641
        %v2643 = vmul.f32 %v2629, 1.442695
        %v2644 = vpow.pop %v2643
        %v2645 = vmul.f32 %v2630, 1.442695
        %v2646 = vpow.pop %v2645
        %v2647 = vsel %vm1457, %v2632, 0.0
        %2648 = vadd.xlane.f32.xlu0 %v2647
        %v2649 = vpop.xlane.xlu0 %2648
        %v2650 = vsel %vm1457, %v2634, 0.0
        %2651 = vadd.xlane.f32.xlu0 %v2650
        %v2652 = vpop.xlane.xlu0 %2651
        %v2653 = vsel %vm1457, %v2636, 0.0
        %2654 = vadd.xlane.f32.xlu0 %v2653
        %v2655 = vpop.xlane.xlu0 %2654
        %v2656 = vsel %vm1457, %v2638, 0.0
        %2657 = vadd.xlane.f32.xlu0 %v2656
        %v2658 = vpop.xlane.xlu0 %2657
        %v2659 = vsel %vm1457, %v2640, 0.0
        %2660 = vadd.xlane.f32.xlu0 %v2659
        %v2661 = vpop.xlane.xlu0 %2660
        %v2662 = vsel %vm1457, %v2642, 0.0
        %2663 = vadd.xlane.f32.xlu0 %v2662
        %v2664 = vpop.xlane.xlu0 %2663
        %v2665 = vsel %vm1457, %v2644, 0.0
        %2666 = vadd.xlane.f32.xlu0 %v2665
        %v2667 = vpop.xlane.xlu0 %2666
        %v2668 = vsel %vm1457, %v2646, 0.0
        %2669 = vadd.xlane.f32.xlu0 %v2668
        %v2670 = vpop.xlane.xlu0 %2669
        %v2671 = vrcp.pop %v2649
        %v2672 = vrcp.pop %v2652
        %v2673 = vrcp.pop %v2655
        %v2674 = vrcp.pop %v2658
        %v2675 = vrcp.pop %v2661
        %v2676 = vrcp.pop %v2664
        %v2677 = vrcp.pop %v2667
        %v2678 = vrcp.pop %v2670
        %v2679 = vmul.f32 %v2632, %v2671
        %v2680 = vmul.f32 %v2634, %v2672
        %v2681 = vmul.f32 %v2636, %v2673
        %v2682 = vmul.f32 %v2638, %v2674
        %v2683 = vmul.f32 %v2640, %v2675
        %v2684 = vmul.f32 %v2642, %v2676
        %v2685 = vmul.f32 %v2644, %v2677
        %v2686 = vmul.f32 %v2646, %v2678
        %v2687 = vpack.c.bf16 %v2680, %v2679
        %v2688 = vpack.c.bf16 %v2682, %v2681
        %v2689 = vpack.c.bf16 %v2684, %v2683
        %v2690 = vpack.c.bf16 %v2686, %v2685
        %v2691 = vpack.c.bf16 %v2516, %v2515
        %v2692 = vpack.c.bf16 %v2518, %v2517
        %v2693 = vpack.c.bf16 %v2520, %v2519
        %v2694 = vpack.c.bf16 %v2522, %v2521
        %v2696 = vsel %vm1457, %v2687, 0
        %v2699 = vsel %vm1457, %v2688, 0
        %v2702 = vsel %vm1457, %v2689, 0
        %v2705 = vsel %vm1457, %v2690, 0
        %2707 = vmatprep.subr.bf16.mxu0 0
        %2708 = vmatpush1.bf16.msra.mxu0 0
        %2709 = vmatprep.subr.bf16.mxu0 0
        %2710 = vmatpush1.bf16.msra.mxu0 0
        %2711 = vmatprep.subr.bf16.mxu0 0
        %2712 = vmatpush1.bf16.msra.mxu0 0
        %2713 = vmatprep.subr.bf16.mxu0 0
        %2714 = vmatpush1.bf16.msra.mxu0 0
        %2715 = vmatprep.subr.bf16.mxu0 0
        %2716 = vmatpush1.bf16.msra.mxu0 %v2694
        %2717 = vmatprep.subr.bf16.mxu0 0
        %2718 = vmatpush1.bf16.msra.mxu0 %v2693
        %2719 = vmatprep.subr.bf16.mxu0 0
        %2720 = vmatpush1.bf16.msra.mxu0 %v2692
        %2721 = vmatprep.subr.bf16.mxu0 0
        %2722 = vmatpush1.bf16.msra.mxu0 %v2691
        %2723 = vmatprep.subr.bf16.mxu0 0
        %2724 = vmatpush2.bf16.msra.mxu0 0
        %2725 = vmatprep.subr.bf16.mxu0 0
        %2726 = vmatpush2.bf16.msra.mxu0 0
        %2727 = vmatprep.subr.bf16.mxu0 0
        %2728 = vmatpush2.bf16.msra.mxu0 0
        %2729 = vmatprep.subr.bf16.mxu0 0
        %2730 = vmatpush2.bf16.msra.mxu0 0
        %2731 = vmatprep.subr.bf16.mxu0 0
        %2732 = vmatpush2.bf16.msra.mxu0 0
        %2733 = vmatprep.subr.bf16.mxu0 0
        %2734 = vmatpush2.bf16.msra.mxu0 0
        %2735 = vmatprep.subr.bf16.mxu0 0
        %2736 = vmatpush2.bf16.msra.mxu0 0
        %2737 = vmatprep.subr.bf16.mxu0 0
        %2738 = vmatpush2.bf16.msra.mxu0 0
        %2739 = vmatprep.mubr.bf16.mxu0 0
        %2740 = vmatmul.mubr.bf16.gmra.mxu0 %v2696
        %v2741 = vpop.f32.mrf.mxu0
        %v2742 = vadd.f32 %v2523, %v2741
        %v2743 = vpop.f32.mrf.mxu0
        %v2744 = vpop.f32.mrf.mxu0
        %v2745 = vadd.f32 %v2524, %v2744
        %v2746 = vpop.f32.mrf.mxu0
        %2747 = vmatprep.mubr.bf16.mxu0 0
        %2748 = vmatmul.mubr.bf16.gmra.mxu0 %v2699
        %v2749 = vpop.f32.mrf.mxu0
        %v2750 = vadd.f32 %v2525, %v2749
        %v2751 = vpop.f32.mrf.mxu0
        %v2752 = vpop.f32.mrf.mxu0
        %v2753 = vadd.f32 %v2526, %v2752
        %v2754 = vpop.f32.mrf.mxu0
        %2755 = vmatprep.mubr.bf16.mxu0 0
        %2756 = vmatmul.mubr.bf16.gmra.mxu0 %v2702
        %v2757 = vpop.f32.mrf.mxu0
        %v2758 = vadd.f32 %v2527, %v2757
        %v2759 = vpop.f32.mrf.mxu0
        %v2760 = vpop.f32.mrf.mxu0
        %v2761 = vadd.f32 %v2528, %v2760
        %v2762 = vpop.f32.mrf.mxu0
        %2763 = vmatprep.mubr.bf16.mxu0 0
        %2764 = vmatmul.mubr.bf16.gmra.mxu0 %v2705
        %v2765 = vpop.f32.mrf.mxu0
        %v2766 = vadd.f32 %v2529, %v2765
        %v2767 = vpop.f32.mrf.mxu0
        %v2768 = vpop.f32.mrf.mxu0
        %v2769 = vadd.f32 %v2530, %v2768
        %v2770 = vpop.f32.mrf.mxu0
        %2771 = vdwg.mxu0
        %v2772 = vlaneseq
        %v2773 = vshrl.u32 %v2772, 7
        %v2774 = vsub.s32 4, %v2773
        %v2775 = vrot.slane %v1362, %v2774
        %v2776 = vadd.f32 %v2742, %v2775
        %v2777 = vadd.f32 %v2745, %v2775
        %v2778 = vadd.f32 %v2750, %v2775
        %v2779 = vadd.f32 %v2753, %v2775
        %v2780 = vadd.f32 %v2758, %v2775
        %v2781 = vadd.f32 %v2761, %v2775
        %v2782 = vadd.f32 %v2766, %v2775
        %v2783 = vadd.f32 %v2769, %v2775
        %v2784 = vmax.f32 %v2776, %v1643
        %v2785 = vmax.f32 %v2777, %v1643
        %v2786 = vmax.f32 %v2778, %v1643
        %v2787 = vmax.f32 %v2779, %v1643
        %v2788 = vmax.f32 %v2780, %v1643
        %v2789 = vmax.f32 %v2781, %v1643
        %v2790 = vmax.f32 %v2782, %v1643
        %v2791 = vmax.f32 %v2783, %v1643
        %v2792 = vadd.f32 %v2507, %v2784
        %v2793 = vadd.f32 %v2508, %v2785
        %v2794 = vadd.f32 %v2509, %v2786
        %v2795 = vadd.f32 %v2510, %v2787
        %v2796 = vadd.f32 %v2511, %v2788
        %v2797 = vadd.f32 %v2512, %v2789
        %v2798 = vadd.f32 %v2513, %v2790
        %v2799 = vadd.f32 %v2514, %v2791
        %v2800 = vmul.f32 %v2792, 0.2
        %v2801 = vmul.f32 %v2793, 0.2
        %v2802 = vmul.f32 %v2794, 0.2
        %v2803 = vmul.f32 %v2795, 0.2
        %v2804 = vmul.f32 %v2796, 0.2
        %v2805 = vmul.f32 %v2797, 0.2
        %v2806 = vmul.f32 %v2798, 0.2
        %v2807 = vmul.f32 %v2799, 0.2
        %2808 = vst [vmem:[#allocation3] sm:$0xff] %v2800
        %2809 = vst [vmem:[#allocation3 + $0x8] sm:$0xff] %v2801
        %2810 = vst [vmem:[#allocation3 + $0x10] sm:$0xff] %v2802
        %2811 = vst [vmem:[#allocation3 + $0x18] sm:$0xff] %v2803
        %2812 = vst [vmem:[#allocation3 + $0x20] sm:$0xff] %v2804
        %2813 = vst [vmem:[#allocation3 + $0x28] sm:$0xff] %v2805
        %2814 = vst [vmem:[#allocation3 + $0x30] sm:$0xff] %v2806
        %2815 = vst [vmem:[#allocation3 + $0x38] sm:$0xff] %v2807
        // Predicated region
        $region41: #{gcn_pred_forward.1} parent=35 // pred_check
          %p2816 = pneg %p128
        $region42: #{gcn_pred_forward.1} parent=35 // pred_check_branch
          %2818 = sbr.rel (%p2816) target = $region44
        $region43: #{gcn_pred_forward.1} parent=35 // pred_region
          %s2820 = ssub.s32 1024, 1024
          %2821 = vsyncadd [#allocation4], %s2820
          %s2822 = sshll.u32 [#allocation3], 4
          %s2823 = int_to_ptr.vmem [resolvable:$true] %s2822
          %2828 = dma.vmem_to_hbm [thread:$0]  %s2823, 1024, %s4, [#allocation4], 128, 128, 8
        $region44: #{gcn_pred_forward.1} parent=35 // pred_fallthru
          _
        // Predicated region
        $region45: #{gcn_pred_forward.1} parent=35 // pred_check
          %p2829 = pneg %p128
        $region46: #{gcn_pred_forward.1} parent=35 // pred_check_branch
          %2831 = sbr.rel (%p2829) target = $region48
        $region47: #{gcn_pred_forward.1} parent=35 // pred_region
          %2832 = dma.done [#allocation4], 1024
        $region48: #{gcn_pred_forward.1} parent=35 // pred_fallthru
          _
      $region36: #{gcn_pred_forward.1} parent=5 // pred_fallthru
        _
      %p2833 = scmp.le.s32.totalorder 2, %s11
      // Predicated region
      $region49: #{gcn_pred_forward.1} parent=5 // pred_check
        %p2834 = pneg %p2833
      $region50: #{gcn_pred_forward.1} parent=5 // pred_check_branch
        %2836 = sbr.rel (%p2834) target = $region52
      $region51: #{gcn_pred_forward.1} parent=5 // pred_region
        %s2837 = ssub.s32 %s11, 2
      $region52: #{gcn_pred_forward.1} parent=5 // pred_fallthru
        _
    $region6: #{gcn_pred_forward.1} parent=1 // loop_footer
      %s15 = sadd.s32 1, %s11
    $region7: #{gcn_pred_forward.1} parent=1 // loop_footer_branch
      %10 = sbr.rel target = $region3
    $region8: #{gcn_pred_forward.1} parent=1 // loop_exit
      _
    %2838 = vsyncpa [#allocation4], 1
    %s2839 = scalar_lea.sflag [#allocation4], 1
    %2840 = vsyncpa %s2839, 1

</llo_original>
